<compile_context>
chip_gen: v7x
topology: tpu7x:2x2x1
jax: 0.10.0
libtpu: 0.0.40
codegen_flags: <defaults>
</compile_context>

<pallas_src>
import functools

import jax
import jax.numpy as jnp
from jax import lax
from jax.experimental import pallas as pl
from jax.experimental.pallas import tpu as pltpu


def _conv2d_kernel(x_ref, w_ref, b_ref, o_ref, xpad_ref,
                   *, kh, kw, stride, pad, ho, wo):
    """Whole batch in one step: in-kernel pad + fused im2col + MXU matmul.

    x_ref:    (N, Cin, H, W)        unpadded NCHW input
    w_ref:    (Cout, KH*KW*Cin)     weights, rows ordered (i, j, cin)
    b_ref:    (Cout, 1)             bias
    o_ref:    (N, Cout, Ho*Wo)      lane-dense output (Ho*Wo = 256 on lanes)
    xpad_ref: (N, Cin, Hp, Wp)      VMEM scratch holding the zero-padded input
    """
    n, cin, h, w = x_ref.shape
    cout = w_ref.shape[0]

    # ---- in-kernel zero padding (replaces the jnp.pad HLO in the wrapper) ---
    xpad_ref[...] = jnp.zeros_like(xpad_ref)
    xpad_ref[:, :, pl.ds(pad, h), pl.ds(pad, w)] = x_ref[...]

    def win(start, size):
        # Ref-level (optionally strided) window read.
        if stride == 1:
            return pl.ds(start, size)
        return pl.ds(start, size, stride=stride)

    # ---- im2col: KH*KW window reads straight from the padded VMEM scratch ---
    # Row order of the contraction axis is (i, j, cin), matching w_ref.
    taps = []
    for i in range(kh):                 # small static ints -> unrolled
        for j in range(kw):
            taps.append(xpad_ref[:, :, win(i, ho), win(j, wo)])  # (N,Cin,Ho,Wo)
    slab = jnp.concatenate(taps, axis=1)                 # (N, K*K*Cin, Ho, Wo)
    slab = slab.reshape(n, kh * kw * cin, ho * wo)       # single relayout total

    # ---- one small lane-dense MXU matmul per batch element (no transposes) --
    bias = b_ref[...].astype(jnp.float32)                # (Cout, 1)
    for b in range(n):                                   # n is tiny and static
        acc = jnp.dot(w_ref[...], slab[b],
                      preferred_element_type=jnp.float32)        # (Cout, Ho*Wo)
        o_ref[b] = (acc + bias).astype(o_ref.dtype)


def prepare_prediction_layer_params(weight_oihw, bias):
    """One-time parameter re-layout (amortized across forward calls):
    OIHW -> (Cout, KH*KW*Cin) with row order (i, j, cin); bias -> (Cout, 1)."""
    cout, cin, kh, kw = weight_oihw.shape
    w_flat = jnp.transpose(weight_oihw, (0, 2, 3, 1)).reshape(cout, kh * kw * cin)
    b2d = bias.reshape(cout, 1)
    return w_flat, b2d


def prediction_layer_pallas(x_nchw, w_flat, b2d, *, kh, kw, stride, padding):
    """Conv2d forward matching torch.nn.Conv2d(channels_in, channels_out,
    kernel_size, stride, padding). Input/output are NCHW like PyTorch.
    `w_flat`/`b2d` come from `prepare_prediction_layer_params`."""
    n, cin, h, w = x_nchw.shape
    cout, kk_cin = w_flat.shape
    assert kk_cin == kh * kw * cin

    ho = (h + 2 * padding - kh) // stride + 1
    wo = (w + 2 * padding - kw) // stride + 1
    hp, wp = h + 2 * padding, w + 2 * padding

    kernel = functools.partial(
        _conv2d_kernel, kh=kh, kw=kw, stride=stride, pad=padding, ho=ho, wo=wo
    )

    out = pl.pallas_call(
        kernel,
        out_shape=jax.ShapeDtypeStruct((n, cout, ho * wo), x_nchw.dtype),
        grid_spec=pltpu.PrefetchScalarGridSpec(
            num_scalar_prefetch=0,
            grid=(1,),                                  # single grid step
            in_specs=[
                # All blocks equal the full array dims -> (8,128) rule trivially
                # satisfied; whole input DMA'd in one block (no per-batch grid).
                pl.BlockSpec((n, cin, h, w), lambda g: (0, 0, 0, 0)),
                pl.BlockSpec((cout, kk_cin), lambda g: (0, 0)),
                pl.BlockSpec((cout, 1), lambda g: (0, 0)),
            ],
            # lane-dense output block: last dim Ho*Wo (multiple of 128 here).
            out_specs=pl.BlockSpec((n, cout, ho * wo), lambda g: (0, 0, 0)),
            scratch_shapes=[pltpu.VMEM((n, cin, hp, wp), x_nchw.dtype)],
        ),
        compiler_params=pltpu.CompilerParams(
            dimension_semantics=("arbitrary",)
        ),
    )(x_nchw, w_flat, b2d)

    # Split the flat spatial dim back out: free (metadata-level) reshape,
    # output is already NCHW-ordered.
    return out.reshape(n, cout, ho, wo)


def _init_conv_params(key, cin, cout, kh, kw):
    """Deterministic init mimicking torch.nn.Conv2d defaults
    (uniform(-bound, bound), bound = 1/sqrt(fan_in))."""
    kw_key, kb_key = jax.random.split(key)
    fan_in = cin * kh * kw
    bound = 1.0 / jnp.sqrt(float(fan_in))
    weight = jax.random.uniform(
        kw_key, (cout, cin, kh, kw), jnp.float32, -bound, bound
    )
    bias = jax.random.uniform(kb_key, (cout,), jnp.float32, -bound, bound)
    return weight, bias


if __name__ == "__main__":
    # Small shapes consistent with the module: batch=2, C_in=4, C_out=8,
    # spatial 16x16, kernel 3x3, stride 1, padding 1.
    key = jax.random.PRNGKey(0)
    x_key, p_key = jax.random.split(key)

    N, CIN, H, W = 2, 4, 16, 16
    COUT, K, STRIDE, PAD = 8, 3, 1, 1

    x = jax.random.normal(x_key, (N, CIN, H, W), jnp.float32)
    weight, bias = _init_conv_params(p_key, CIN, COUT, K, K)

    # One-time parameter re-layout (hoisted off the per-call path).
    w_flat, b2d = prepare_prediction_layer_params(weight, bias)

    out = prediction_layer_pallas(
        x, w_flat, b2d, kh=K, kw=K, stride=STRIDE, padding=PAD
    )
    out = jax.block_until_ready(out)

    # Cross-check against XLA's conv for correctness.
    # TODO(synk): the stride>1 path (strided pl.ds window reads) is not
    # exercised by this stride=1 check.
    ref = lax.conv_general_dilated(
        x, weight,
        window_strides=(STRIDE, STRIDE),
        padding=[(PAD, PAD), (PAD, PAD)],
        dimension_numbers=("NCHW", "OIHW", "NCHW"),
    ) + bias.reshape(1, COUT, 1, 1)

    assert out.shape == (N, COUT, H, W), out.shape
    assert jnp.allclose(out, ref, atol=1e-4, rtol=1e-4), float(
        jnp.max(jnp.abs(out - ref))
    )

    print("KERNEL_OK")
</pallas_src>

<mosaic_0001>
module attributes {stable_mosaic.version = 11 : i64} {
  func.func @_conv2d_kernel(%arg0: i32, %arg1: memref<2x4x16x16xf32, #tpu.memory_space<vmem>>, %arg2: memref<8x36xf32, #tpu.memory_space<vmem>>, %arg3: memref<8x1xf32, #tpu.memory_space<vmem>>, %arg4: memref<2x8x256xf32, #tpu.memory_space<vmem>>, %arg5: memref<2x4x18x18xf32, #tpu.memory_space<vmem>>) attributes {dimension_semantics = [#tpu.dimension_semantics<arbitrary>], iteration_bounds = array<i64: 1>, scalar_prefetch = 0 : i64, scratch_operands = 1 : i64, tpu.core_type = #tpu.core_type<tc>, window_params = [{pipeline_mode = #tpu.pipeline_mode<synchronous>, transform_indices = @transform_0, window_bounds = array<i64: 2, 4, 16, 16>}, {pipeline_mode = #tpu.pipeline_mode<synchronous>, transform_indices = @transform_1, window_bounds = array<i64: 8, 36>}, {pipeline_mode = #tpu.pipeline_mode<synchronous>, transform_indices = @transform_2, window_bounds = array<i64: 8, 1>}, {pipeline_mode = #tpu.pipeline_mode<synchronous>, transform_indices = @transform_3, window_bounds = array<i64: 2, 8, 256>}]} {
    %cst = arith.constant 0.000000e+00 : f32
    %0 = vector.broadcast %cst : f32 to vector<2x4x18x18xf32>
    %c0 = arith.constant 0 : index
    %c0_0 = arith.constant 0 : index
    %c0_1 = arith.constant 0 : index
    %c0_2 = arith.constant 0 : index
    %1 = vector.load %arg5[%c0, %c0_0, %c0_1, %c0_2] : memref<2x4x18x18xf32, #tpu.memory_space<vmem>>, vector<2x4x18x18xf32>
    tpu.vector_store %arg5[%c0, %c0_0, %c0_1, %c0_2], %0 {strides = array<i32>} : memref<2x4x18x18xf32, #tpu.memory_space<vmem>>, vector<2x4x18x18xf32>,
    %c0_3 = arith.constant 0 : index
    %c0_4 = arith.constant 0 : index
    %c0_5 = arith.constant 0 : index
    %c0_6 = arith.constant 0 : index
    %2 = vector.load %arg1[%c0_3, %c0_4, %c0_5, %c0_6] : memref<2x4x16x16xf32, #tpu.memory_space<vmem>>, vector<2x4x16x16xf32>
    %c0_7 = arith.constant 0 : index
    %c0_8 = arith.constant 0 : index
    %c1 = arith.constant 1 : index
    %c1_9 = arith.constant 1 : index
    %3 = vector.load %arg5[%c0_7, %c0_8, %c1, %c1_9] : memref<2x4x18x18xf32, #tpu.memory_space<vmem>>, vector<2x4x16x16xf32>
    tpu.vector_store %arg5[%c0_7, %c0_8, %c1, %c1_9], %2 {strides = array<i32>} : memref<2x4x18x18xf32, #tpu.memory_space<vmem>>, vector<2x4x16x16xf32>,
    %c0_10 = arith.constant 0 : index
    %c0_11 = arith.constant 0 : index
    %c0_12 = arith.constant 0 : index
    %c0_13 = arith.constant 0 : index
    %4 = vector.load %arg5[%c0_10, %c0_11, %c0_12, %c0_13] : memref<2x4x18x18xf32, #tpu.memory_space<vmem>>, vector<2x4x16x16xf32>
    %c0_14 = arith.constant 0 : index
    %c0_15 = arith.constant 0 : index
    %c0_16 = arith.constant 0 : index
    %c1_17 = arith.constant 1 : index
    %5 = vector.load %arg5[%c0_14, %c0_15, %c0_16, %c1_17] : memref<2x4x18x18xf32, #tpu.memory_space<vmem>>, vector<2x4x16x16xf32>
    %c0_18 = arith.constant 0 : index
    %c0_19 = arith.constant 0 : index
    %c0_20 = arith.constant 0 : index
    %c2 = arith.constant 2 : index
    %6 = vector.load %arg5[%c0_18, %c0_19, %c0_20, %c2] : memref<2x4x18x18xf32, #tpu.memory_space<vmem>>, vector<2x4x16x16xf32>
    %c0_21 = arith.constant 0 : index
    %c0_22 = arith.constant 0 : index
    %c1_23 = arith.constant 1 : index
    %c0_24 = arith.constant 0 : index
    %7 = vector.load %arg5[%c0_21, %c0_22, %c1_23, %c0_24] : memref<2x4x18x18xf32, #tpu.memory_space<vmem>>, vector<2x4x16x16xf32>
    %c0_25 = arith.constant 0 : index
    %c0_26 = arith.constant 0 : index
    %c1_27 = arith.constant 1 : index
    %c1_28 = arith.constant 1 : index
    %8 = vector.load %arg5[%c0_25, %c0_26, %c1_27, %c1_28] : memref<2x4x18x18xf32, #tpu.memory_space<vmem>>, vector<2x4x16x16xf32>
    %c0_29 = arith.constant 0 : index
    %c0_30 = arith.constant 0 : index
    %c1_31 = arith.constant 1 : index
    %c2_32 = arith.constant 2 : index
    %9 = vector.load %arg5[%c0_29, %c0_30, %c1_31, %c2_32] : memref<2x4x18x18xf32, #tpu.memory_space<vmem>>, vector<2x4x16x16xf32>
    %c0_33 = arith.constant 0 : index
    %c0_34 = arith.constant 0 : index
    %c2_35 = arith.constant 2 : index
    %c0_36 = arith.constant 0 : index
    %10 = vector.load %arg5[%c0_33, %c0_34, %c2_35, %c0_36] : memref<2x4x18x18xf32, #tpu.memory_space<vmem>>, vector<2x4x16x16xf32>
    %c0_37 = arith.constant 0 : index
    %c0_38 = arith.constant 0 : index
    %c2_39 = arith.constant 2 : index
    %c1_40 = arith.constant 1 : index
    %11 = vector.load %arg5[%c0_37, %c0_38, %c2_39, %c1_40] : memref<2x4x18x18xf32, #tpu.memory_space<vmem>>, vector<2x4x16x16xf32>
    %c0_41 = arith.constant 0 : index
    %c0_42 = arith.constant 0 : index
    %c2_43 = arith.constant 2 : index
    %c2_44 = arith.constant 2 : index
    %12 = vector.load %arg5[%c0_41, %c0_42, %c2_43, %c2_44] : memref<2x4x18x18xf32, #tpu.memory_space<vmem>>, vector<2x4x16x16xf32>
    %13 = tpu.concatenate %4, %5, %6, %7, %8, %9, %10, %11, %12 in 1 : vector<2x4x16x16xf32>, vector<2x4x16x16xf32>, vector<2x4x16x16xf32>, vector<2x4x16x16xf32>, vector<2x4x16x16xf32>, vector<2x4x16x16xf32>, vector<2x4x16x16xf32>, vector<2x4x16x16xf32>, vector<2x4x16x16xf32> -> vector<2x36x16x16xf32>
    %14 = vector.shape_cast %13 : vector<2x36x16x16xf32> to vector<2x36x256xf32>
    %c0_45 = arith.constant 0 : index
    %c0_46 = arith.constant 0 : index
    %15 = vector.load %arg3[%c0_45, %c0_46] : memref<8x1xf32, #tpu.memory_space<vmem>>, vector<8x1xf32>
    %c0_47 = arith.constant 0 : index
    %c0_48 = arith.constant 0 : index
    %16 = vector.load %arg2[%c0_47, %c0_48] : memref<8x36xf32, #tpu.memory_space<vmem>>, vector<8x36xf32>
    %17 = vector.extract_strided_slice %14 {offsets = [0, 0, 0], sizes = [1, 36, 256], strides = [1, 1, 1]} : vector<2x36x256xf32> to vector<1x36x256xf32>
    %18 = vector.shape_cast %17 : vector<1x36x256xf32> to vector<36x256xf32>
    %cst_49 = arith.constant dense<0.000000e+00> : vector<8x256xf32>
    %19 = tpu.matmul %16, %18, %cst_49 {dimension_numbers = #tpu.dot_dimension_numbers<[1], [0], [0], [1], [0, 0, 1, 1], [], []>} : vector<8x36xf32>, vector<36x256xf32>, vector<8x256xf32> -> vector<8x256xf32>
    %20 = vector.broadcast %15 : vector<8x1xf32> to vector<8x256xf32>
    %21 = arith.addf %19, %20 : vector<8x256xf32>
    %c0_50 = arith.constant 0 : index
    %c0_51 = arith.constant 0 : index
    %c0_52 = arith.constant 0 : index
    %22 = vector.load %arg4[%c0_50, %c0_51, %c0_52] : memref<2x8x256xf32, #tpu.memory_space<vmem>>, vector<1x8x256xf32>
    %23 = vector.shape_cast %22 : vector<1x8x256xf32> to vector<8x256xf32>
    %24 = vector.shape_cast %21 : vector<8x256xf32> to vector<1x8x256xf32>
    tpu.vector_store %arg4[%c0_50, %c0_51, %c0_52], %24 {strides = array<i32>} : memref<2x8x256xf32, #tpu.memory_space<vmem>>, vector<1x8x256xf32>,
    %c0_53 = arith.constant 0 : index
    %c0_54 = arith.constant 0 : index
    %25 = vector.load %arg2[%c0_53, %c0_54] : memref<8x36xf32, #tpu.memory_space<vmem>>, vector<8x36xf32>
    %26 = vector.extract_strided_slice %14 {offsets = [1, 0, 0], sizes = [1, 36, 256], strides = [1, 1, 1]} : vector<2x36x256xf32> to vector<1x36x256xf32>
    %27 = vector.shape_cast %26 : vector<1x36x256xf32> to vector<36x256xf32>
    %cst_55 = arith.constant dense<0.000000e+00> : vector<8x256xf32>
    %28 = tpu.matmul %25, %27, %cst_55 {dimension_numbers = #tpu.dot_dimension_numbers<[1], [0], [0], [1], [0, 0, 1, 1], [], []>} : vector<8x36xf32>, vector<36x256xf32>, vector<8x256xf32> -> vector<8x256xf32>
    %29 = vector.broadcast %15 : vector<8x1xf32> to vector<8x256xf32>
    %30 = arith.addf %28, %29 : vector<8x256xf32>
    %c1_56 = arith.constant 1 : index
    %c0_57 = arith.constant 0 : index
    %c0_58 = arith.constant 0 : index
    %31 = vector.load %arg4[%c1_56, %c0_57, %c0_58] : memref<2x8x256xf32, #tpu.memory_space<vmem>>, vector<1x8x256xf32>
    %32 = vector.shape_cast %31 : vector<1x8x256xf32> to vector<8x256xf32>
    %33 = vector.shape_cast %30 : vector<8x256xf32> to vector<1x8x256xf32>
    tpu.vector_store %arg4[%c1_56, %c0_57, %c0_58], %33 {strides = array<i32>} : memref<2x8x256xf32, #tpu.memory_space<vmem>>, vector<1x8x256xf32>,
    return
  }
  func.func @transform_0(%arg0: i32) -> (i32, i32, i32, i32) {
    %c0_i32 = arith.constant 0 : i32
    %c0_i32_0 = arith.constant 0 : i32
    %c0_i32_1 = arith.constant 0 : i32
    %c0_i32_2 = arith.constant 0 : i32
    %c0_i32_3 = arith.constant 0 : i32
    return %c0_i32, %c0_i32_0, %c0_i32_1, %c0_i32_2 : i32, i32, i32, i32
  }
  func.func @transform_1(%arg0: i32) -> (i32, i32) {
    %c0_i32 = arith.constant 0 : i32
    %c0_i32_0 = arith.constant 0 : i32
    %c0_i32_1 = arith.constant 0 : i32
    return %c0_i32, %c0_i32_0 : i32, i32
  }
  func.func @transform_2(%arg0: i32) -> (i32, i32) {
    %c0_i32 = arith.constant 0 : i32
    %c0_i32_0 = arith.constant 0 : i32
    %c0_i32_1 = arith.constant 0 : i32
    return %c0_i32, %c0_i32_0 : i32, i32
  }
  func.func @transform_3(%arg0: i32) -> (i32, i32, i32) {
    %c0_i32 = arith.constant 0 : i32
    %c0_i32_0 = arith.constant 0 : i32
    %c0_i32_1 = arith.constant 0 : i32
    %c0_i32_2 = arith.constant 0 : i32
    return %c0_i32, %c0_i32_0, %c0_i32_1 : i32, i32, i32
  }
}

</mosaic_0001>

<llo_original>
// kernel: tpu_custom_call.1
$region0: #{tpu_custom_call.1}
  #allocation0 [shape = 'u32[]', space=smem, size = 0x4, offset = 0x4, fixed_abs, tag = 'smem constant byte address 0x4 - core index']
  #allocation1 [shape = 'u32[144,128]{1,0:T(1,128)}', space=vmem, size = 0x12000, scoped, tag = 'internal scratch']
  #allocation2 [shape = 'f32[2,4,18,18]{3,2,1,0:T(8,128)}', space=vmem, size = 0x18000, scoped, tag = 'scratch operand']
  %s0 = inlined_call_operand.hbm [shape: f32[2,4,16,16], index: 0, kind: input, shape index: {}]
  %s1 = inlined_call_operand.vmem [shape: f32[8,36], index: 1, kind: input, shape index: {}]
  %s2 = inlined_call_operand.vmem [shape: f32[8,1], index: 2, kind: input, shape index: {}]
  %s3 = inlined_call_operand.hbm [shape: f32[2,8,256], index: 3, kind: output, shape index: {}]
  %s4 = sld [smem:[#allocation0]]
  $region26: #{tpu_custom_call.1} parent=0
    _
  %s6 = ssub.s32 1, %s4
  %s7 = scalar_select 0, %s6, %s4
  $region1: #{tpu_custom_call.1} parent=0
    #allocation3 [shape = 'u8[65536]{0}', space=vmem, size = 0x10000, scoped, tag = 'input window, operand 0, single buffered']
    #allocation4 [shape = 's32[1]{0}', space=sflag, size = 0x4, scoped, tag = 'scoped memory for tpu_custom_call.1']
    #allocation5 [shape = 's32[1]{0}', space=sflag, size = 0x4, scoped, tag = 'scoped memory for tpu_custom_call.1']
    #allocation6 [shape = 'u8[16384]{0}', space=vmem, size = 0x4000, scoped, tag = 'output window, operand 0, single buffered']
    %8 = vsyncpa [#allocation4], 0
    %9 = vsyncpa [#allocation5], 0
    // Predicated region
    $region2: #{tpu_custom_call.1} parent=1 // pred_check
      _
    $region3: #{tpu_custom_call.1} parent=1 // pred_check_branch
      %11 = sbr.rel (0) target = $region5
    $region4: #{tpu_custom_call.1} parent=1 // pred_region
      %s13 = ssub.s32 2048, 2048
      %14 = vsyncadd [#allocation4], %s13
      %s15 = sshll.u32 [#allocation3], 4
      %s16 = int_to_ptr.vmem [resolvable:$true] %s15
      %21 = dma.hbm_to_vmem [thread:$0]  %s0, 2048, %s16, [#allocation4], 128, 128, 8
    $region5: #{tpu_custom_call.1} parent=1 // pred_fallthru
      _
    // Predicated region
    $region6: #{tpu_custom_call.1} parent=1 // pred_check
      _
    $region7: #{tpu_custom_call.1} parent=1 // pred_check_branch
      %23 = sbr.rel (0) target = $region9
    $region8: #{tpu_custom_call.1} parent=1 // pred_region
      _
    $region9: #{tpu_custom_call.1} parent=1 // pred_fallthru
      _
    // Predicated region
    $region10: #{tpu_custom_call.1} parent=1 // pred_check
      _
    $region11: #{tpu_custom_call.1} parent=1 // pred_check_branch
      %25 = sbr.rel (0) target = $region13
    $region12: #{tpu_custom_call.1} parent=1 // pred_region
      _
    $region13: #{tpu_custom_call.1} parent=1 // pred_fallthru
      _
    // Predicated region
    $region14: #{tpu_custom_call.1} parent=1 // pred_check
      _
    $region15: #{tpu_custom_call.1} parent=1 // pred_check_branch
      %27 = sbr.rel (0) target = $region17
    $region16: #{tpu_custom_call.1} parent=1 // pred_region
      %28 = dma.done [#allocation4], 2048
    $region17: #{tpu_custom_call.1} parent=1 // pred_fallthru
      _
    %vm29 = vcmask 146432
    %30 = vst.msk [vmem:[#allocation2] sm:$0xff] %vm29, 0.0
    %31 = vst.msk [vmem:[#allocation2 + $0x8] sm:$0xff] %vm29, 0.0
    %vm32 = vcmask 140288
    %33 = vst.msk [vmem:[#allocation2 + $0x10] sm:$0x3] %vm32, 0.0
    %34 = vst.msk [vmem:[#allocation2 + $0x18] sm:$0xff] %vm29, 0.0
    %35 = vst.msk [vmem:[#allocation2 + $0x20] sm:$0xff] %vm29, 0.0
    %36 = vst.msk [vmem:[#allocation2 + $0x28] sm:$0x3] %vm32, 0.0
    %37 = vst.msk [vmem:[#allocation2 + $0x30] sm:$0xff] %vm29, 0.0
    %38 = vst.msk [vmem:[#allocation2 + $0x38] sm:$0xff] %vm29, 0.0
    %39 = vst.msk [vmem:[#allocation2 + $0x40] sm:$0x3] %vm32, 0.0
    %40 = vst.msk [vmem:[#allocation2 + $0x48] sm:$0xff] %vm29, 0.0
    %41 = vst.msk [vmem:[#allocation2 + $0x50] sm:$0xff] %vm29, 0.0
    %42 = vst.msk [vmem:[#allocation2 + $0x58] sm:$0x3] %vm32, 0.0
    %43 = vst.msk [vmem:[#allocation2 + $0x60] sm:$0xff] %vm29, 0.0
    %44 = vst.msk [vmem:[#allocation2 + $0x68] sm:$0xff] %vm29, 0.0
    %45 = vst.msk [vmem:[#allocation2 + $0x70] sm:$0x3] %vm32, 0.0
    %46 = vst.msk [vmem:[#allocation2 + $0x78] sm:$0xff] %vm29, 0.0
    %47 = vst.msk [vmem:[#allocation2 + $0x80] sm:$0xff] %vm29, 0.0
    %48 = vst.msk [vmem:[#allocation2 + $0x88] sm:$0x3] %vm32, 0.0
    %49 = vst.msk [vmem:[#allocation2 + $0x90] sm:$0xff] %vm29, 0.0
    %50 = vst.msk [vmem:[#allocation2 + $0x98] sm:$0xff] %vm29, 0.0
    %51 = vst.msk [vmem:[#allocation2 + $0xa0] sm:$0x3] %vm32, 0.0
    %52 = vst.msk [vmem:[#allocation2 + $0xa8] sm:$0xff] %vm29, 0.0
    %53 = vst.msk [vmem:[#allocation2 + $0xb0] sm:$0xff] %vm29, 0.0
    %54 = vst.msk [vmem:[#allocation2 + $0xb8] sm:$0x3] %vm32, 0.0
    %v55 = vld [vmem:[#allocation3] sm:$0xff]
    %v56 = vld [vmem:[#allocation3 + $0x8] sm:$0xff]
    %v57 = vld [vmem:[#allocation3 + $0x10] sm:$0xff]
    %v58 = vld [vmem:[#allocation3 + $0x18] sm:$0xff]
    %v59 = vld [vmem:[#allocation3 + $0x20] sm:$0xff]
    %v60 = vld [vmem:[#allocation3 + $0x28] sm:$0xff]
    %v61 = vld [vmem:[#allocation3 + $0x30] sm:$0xff]
    %v62 = vld [vmem:[#allocation3 + $0x38] sm:$0xff]
    %v63 = vld [vmem:[#allocation3 + $0x40] sm:$0xff]
    %v64 = vld [vmem:[#allocation3 + $0x48] sm:$0xff]
    %v65 = vld [vmem:[#allocation3 + $0x50] sm:$0xff]
    %v66 = vld [vmem:[#allocation3 + $0x58] sm:$0xff]
    %v67 = vld [vmem:[#allocation3 + $0x60] sm:$0xff]
    %v68 = vld [vmem:[#allocation3 + $0x68] sm:$0xff]
    %v69 = vld [vmem:[#allocation3 + $0x70] sm:$0xff]
    %v70 = vld [vmem:[#allocation3 + $0x78] sm:$0xff]
    %87 = vrot.lane.b32.xlu0 %v55, 1
    %v88 = vpop.permute.xlu0 %87
    %89 = vrot.lane.b32.xlu0 %v56, 1
    %v90 = vpop.permute.xlu0 %89
    %91 = vrot.lane.b32.xlu0 %v57, 1
    %v92 = vpop.permute.xlu0 %91
    %93 = vrot.lane.b32.xlu0 %v58, 1
    %v94 = vpop.permute.xlu0 %93
    %95 = vrot.lane.b32.xlu0 %v59, 1
    %v96 = vpop.permute.xlu0 %95
    %97 = vrot.lane.b32.xlu0 %v60, 1
    %v98 = vpop.permute.xlu0 %97
    %99 = vrot.lane.b32.xlu0 %v61, 1
    %v100 = vpop.permute.xlu0 %99
    %101 = vrot.lane.b32.xlu0 %v62, 1
    %v102 = vpop.permute.xlu0 %101
    %103 = vrot.lane.b32.xlu0 %v63, 1
    %v104 = vpop.permute.xlu0 %103
    %105 = vrot.lane.b32.xlu0 %v64, 1
    %v106 = vpop.permute.xlu0 %105
    %107 = vrot.lane.b32.xlu0 %v65, 1
    %v108 = vpop.permute.xlu0 %107
    %109 = vrot.lane.b32.xlu0 %v66, 1
    %v110 = vpop.permute.xlu0 %109
    %111 = vrot.lane.b32.xlu0 %v67, 1
    %v112 = vpop.permute.xlu0 %111
    %113 = vrot.lane.b32.xlu0 %v68, 1
    %v114 = vpop.permute.xlu0 %113
    %115 = vrot.lane.b32.xlu0 %v69, 1
    %v116 = vpop.permute.xlu0 %115
    %117 = vrot.lane.b32.xlu0 %v70, 1
    %v118 = vpop.permute.xlu0 %117
    %vm135 = vcmask 138248
    %136 = vst.msk [vmem:[#allocation2 + $0x1] sm:$0xff] %vm135, %v88
    %137 = vst.msk [vmem:[#allocation2 + $0x9] sm:$0xff] %vm135, %v90
    %138 = vst.msk [vmem:[#allocation2 + $0x19] sm:$0xff] %vm135, %v92
    %139 = vst.msk [vmem:[#allocation2 + $0x21] sm:$0xff] %vm135, %v94
    %140 = vst.msk [vmem:[#allocation2 + $0x31] sm:$0xff] %vm135, %v96
    %141 = vst.msk [vmem:[#allocation2 + $0x39] sm:$0xff] %vm135, %v98
    %142 = vst.msk [vmem:[#allocation2 + $0x49] sm:$0xff] %vm135, %v100
    %143 = vst.msk [vmem:[#allocation2 + $0x51] sm:$0xff] %vm135, %v102
    %144 = vst.msk [vmem:[#allocation2 + $0x61] sm:$0xff] %vm135, %v104
    %145 = vst.msk [vmem:[#allocation2 + $0x69] sm:$0xff] %vm135, %v106
    %146 = vst.msk [vmem:[#allocation2 + $0x79] sm:$0xff] %vm135, %v108
    %147 = vst.msk [vmem:[#allocation2 + $0x81] sm:$0xff] %vm135, %v110
    %148 = vst.msk [vmem:[#allocation2 + $0x91] sm:$0xff] %vm135, %v112
    %149 = vst.msk [vmem:[#allocation2 + $0x99] sm:$0xff] %vm135, %v114
    %150 = vst.msk [vmem:[#allocation2 + $0xa9] sm:$0xff] %vm135, %v116
    %151 = vst.msk [vmem:[#allocation2 + $0xb1] sm:$0xff] %vm135, %v118
    %v152 = vld [vmem:[#allocation2] sm:$0xff]
    %v153 = vld [vmem:[#allocation2 + $0x8] sm:$0xff]
    %v154 = vld [vmem:[#allocation2 + $0x18] sm:$0xff]
    %v155 = vld [vmem:[#allocation2 + $0x20] sm:$0xff]
    %v156 = vld [vmem:[#allocation2 + $0x30] sm:$0xff]
    %v157 = vld [vmem:[#allocation2 + $0x38] sm:$0xff]
    %v158 = vld [vmem:[#allocation2 + $0x48] sm:$0xff]
    %v159 = vld [vmem:[#allocation2 + $0x50] sm:$0xff]
    %v160 = vld [vmem:[#allocation2 + $0x60] sm:$0xff]
    %v161 = vld [vmem:[#allocation2 + $0x68] sm:$0xff]
    %v162 = vld [vmem:[#allocation2 + $0x78] sm:$0xff]
    %v163 = vld [vmem:[#allocation2 + $0x80] sm:$0xff]
    %v164 = vld [vmem:[#allocation2 + $0x90] sm:$0xff]
    %v165 = vld [vmem:[#allocation2 + $0x98] sm:$0xff]
    %v166 = vld [vmem:[#allocation2 + $0xa8] sm:$0xff]
    %v167 = vld [vmem:[#allocation2 + $0xb0] sm:$0xff]
    %v168 = vld [vmem:[#allocation2 + $0x1] sm:$0xff]
    %v169 = vld [vmem:[#allocation2 + $0x9] sm:$0xff]
    %v170 = vld [vmem:[#allocation2 + $0x19] sm:$0xff]
    %v171 = vld [vmem:[#allocation2 + $0x21] sm:$0xff]
    %v172 = vld [vmem:[#allocation2 + $0x31] sm:$0xff]
    %v173 = vld [vmem:[#allocation2 + $0x39] sm:$0xff]
    %v174 = vld [vmem:[#allocation2 + $0x49] sm:$0xff]
    %v175 = vld [vmem:[#allocation2 + $0x51] sm:$0xff]
    %v176 = vld [vmem:[#allocation2 + $0x61] sm:$0xff]
    %v177 = vld [vmem:[#allocation2 + $0x69] sm:$0xff]
    %v178 = vld [vmem:[#allocation2 + $0x79] sm:$0xff]
    %v179 = vld [vmem:[#allocation2 + $0x81] sm:$0xff]
    %v180 = vld [vmem:[#allocation2 + $0x91] sm:$0xff]
    %v181 = vld [vmem:[#allocation2 + $0x99] sm:$0xff]
    %v182 = vld [vmem:[#allocation2 + $0xa9] sm:$0xff]
    %v183 = vld [vmem:[#allocation2 + $0xb1] sm:$0xff]
    %v184 = vld [vmem:[#allocation2 + $0x2] sm:$0xff]
    %v185 = vld [vmem:[#allocation2 + $0xa] sm:$0xff]
    %v186 = vld [vmem:[#allocation2 + $0x1a] sm:$0xff]
    %v187 = vld [vmem:[#allocation2 + $0x22] sm:$0xff]
    %v188 = vld [vmem:[#allocation2 + $0x32] sm:$0xff]
    %v189 = vld [vmem:[#allocation2 + $0x3a] sm:$0xff]
    %v190 = vld [vmem:[#allocation2 + $0x4a] sm:$0xff]
    %v191 = vld [vmem:[#allocation2 + $0x52] sm:$0xff]
    %v192 = vld [vmem:[#allocation2 + $0x62] sm:$0xff]
    %v193 = vld [vmem:[#allocation2 + $0x6a] sm:$0xff]
    %v194 = vld [vmem:[#allocation2 + $0x7a] sm:$0xff]
    %v195 = vld [vmem:[#allocation2 + $0x82] sm:$0xff]
    %v196 = vld [vmem:[#allocation2 + $0x92] sm:$0xff]
    %v197 = vld [vmem:[#allocation2 + $0x9a] sm:$0xff]
    %v198 = vld [vmem:[#allocation2 + $0xaa] sm:$0xff]
    %v199 = vld [vmem:[#allocation2 + $0xb2] sm:$0xff]
    %216 = vrot.lane.b32.xlu0 %v152, 127
    %v217 = vpop.permute.xlu0 %216
    %218 = vrot.lane.b32.xlu0 %v153, 127
    %v219 = vpop.permute.xlu0 %218
    %220 = vrot.lane.b32.xlu0 %v154, 127
    %v221 = vpop.permute.xlu0 %220
    %222 = vrot.lane.b32.xlu0 %v155, 127
    %v223 = vpop.permute.xlu0 %222
    %224 = vrot.lane.b32.xlu0 %v156, 127
    %v225 = vpop.permute.xlu0 %224
    %226 = vrot.lane.b32.xlu0 %v157, 127
    %v227 = vpop.permute.xlu0 %226
    %228 = vrot.lane.b32.xlu0 %v158, 127
    %v229 = vpop.permute.xlu0 %228
    %230 = vrot.lane.b32.xlu0 %v159, 127
    %v231 = vpop.permute.xlu0 %230
    %232 = vrot.lane.b32.xlu0 %v160, 127
    %v233 = vpop.permute.xlu0 %232
    %234 = vrot.lane.b32.xlu0 %v161, 127
    %v235 = vpop.permute.xlu0 %234
    %236 = vrot.lane.b32.xlu0 %v162, 127
    %v237 = vpop.permute.xlu0 %236
    %238 = vrot.lane.b32.xlu0 %v163, 127
    %v239 = vpop.permute.xlu0 %238
    %240 = vrot.lane.b32.xlu0 %v164, 127
    %v241 = vpop.permute.xlu0 %240
    %242 = vrot.lane.b32.xlu0 %v165, 127
    %v243 = vpop.permute.xlu0 %242
    %244 = vrot.lane.b32.xlu0 %v166, 127
    %v245 = vpop.permute.xlu0 %244
    %246 = vrot.lane.b32.xlu0 %v167, 127
    %v247 = vpop.permute.xlu0 %246
    %264 = vrot.lane.b32.xlu0 %v152, 126
    %v265 = vpop.permute.xlu0 %264
    %266 = vrot.lane.b32.xlu0 %v153, 126
    %v267 = vpop.permute.xlu0 %266
    %268 = vrot.lane.b32.xlu0 %v154, 126
    %v269 = vpop.permute.xlu0 %268
    %270 = vrot.lane.b32.xlu0 %v155, 126
    %v271 = vpop.permute.xlu0 %270
    %272 = vrot.lane.b32.xlu0 %v156, 126
    %v273 = vpop.permute.xlu0 %272
    %274 = vrot.lane.b32.xlu0 %v157, 126
    %v275 = vpop.permute.xlu0 %274
    %276 = vrot.lane.b32.xlu0 %v158, 126
    %v277 = vpop.permute.xlu0 %276
    %278 = vrot.lane.b32.xlu0 %v159, 126
    %v279 = vpop.permute.xlu0 %278
    %280 = vrot.lane.b32.xlu0 %v160, 126
    %v281 = vpop.permute.xlu0 %280
    %282 = vrot.lane.b32.xlu0 %v161, 126
    %v283 = vpop.permute.xlu0 %282
    %284 = vrot.lane.b32.xlu0 %v162, 126
    %v285 = vpop.permute.xlu0 %284
    %286 = vrot.lane.b32.xlu0 %v163, 126
    %v287 = vpop.permute.xlu0 %286
    %288 = vrot.lane.b32.xlu0 %v164, 126
    %v289 = vpop.permute.xlu0 %288
    %290 = vrot.lane.b32.xlu0 %v165, 126
    %v291 = vpop.permute.xlu0 %290
    %292 = vrot.lane.b32.xlu0 %v166, 126
    %v293 = vpop.permute.xlu0 %292
    %294 = vrot.lane.b32.xlu0 %v167, 126
    %v295 = vpop.permute.xlu0 %294
    %328 = vrot.lane.b32.xlu0 %v168, 127
    %v329 = vpop.permute.xlu0 %328
    %330 = vrot.lane.b32.xlu0 %v169, 127
    %v331 = vpop.permute.xlu0 %330
    %332 = vrot.lane.b32.xlu0 %v170, 127
    %v333 = vpop.permute.xlu0 %332
    %334 = vrot.lane.b32.xlu0 %v171, 127
    %v335 = vpop.permute.xlu0 %334
    %336 = vrot.lane.b32.xlu0 %v172, 127
    %v337 = vpop.permute.xlu0 %336
    %338 = vrot.lane.b32.xlu0 %v173, 127
    %v339 = vpop.permute.xlu0 %338
    %340 = vrot.lane.b32.xlu0 %v174, 127
    %v341 = vpop.permute.xlu0 %340
    %342 = vrot.lane.b32.xlu0 %v175, 127
    %v343 = vpop.permute.xlu0 %342
    %344 = vrot.lane.b32.xlu0 %v176, 127
    %v345 = vpop.permute.xlu0 %344
    %346 = vrot.lane.b32.xlu0 %v177, 127
    %v347 = vpop.permute.xlu0 %346
    %348 = vrot.lane.b32.xlu0 %v178, 127
    %v349 = vpop.permute.xlu0 %348
    %350 = vrot.lane.b32.xlu0 %v179, 127
    %v351 = vpop.permute.xlu0 %350
    %352 = vrot.lane.b32.xlu0 %v180, 127
    %v353 = vpop.permute.xlu0 %352
    %354 = vrot.lane.b32.xlu0 %v181, 127
    %v355 = vpop.permute.xlu0 %354
    %356 = vrot.lane.b32.xlu0 %v182, 127
    %v357 = vpop.permute.xlu0 %356
    %358 = vrot.lane.b32.xlu0 %v183, 127
    %v359 = vpop.permute.xlu0 %358
    %376 = vrot.lane.b32.xlu0 %v168, 126
    %v377 = vpop.permute.xlu0 %376
    %378 = vrot.lane.b32.xlu0 %v169, 126
    %v379 = vpop.permute.xlu0 %378
    %380 = vrot.lane.b32.xlu0 %v170, 126
    %v381 = vpop.permute.xlu0 %380
    %382 = vrot.lane.b32.xlu0 %v171, 126
    %v383 = vpop.permute.xlu0 %382
    %384 = vrot.lane.b32.xlu0 %v172, 126
    %v385 = vpop.permute.xlu0 %384
    %386 = vrot.lane.b32.xlu0 %v173, 126
    %v387 = vpop.permute.xlu0 %386
    %388 = vrot.lane.b32.xlu0 %v174, 126
    %v389 = vpop.permute.xlu0 %388
    %390 = vrot.lane.b32.xlu0 %v175, 126
    %v391 = vpop.permute.xlu0 %390
    %392 = vrot.lane.b32.xlu0 %v176, 126
    %v393 = vpop.permute.xlu0 %392
    %394 = vrot.lane.b32.xlu0 %v177, 126
    %v395 = vpop.permute.xlu0 %394
    %396 = vrot.lane.b32.xlu0 %v178, 126
    %v397 = vpop.permute.xlu0 %396
    %398 = vrot.lane.b32.xlu0 %v179, 126
    %v399 = vpop.permute.xlu0 %398
    %400 = vrot.lane.b32.xlu0 %v180, 126
    %v401 = vpop.permute.xlu0 %400
    %402 = vrot.lane.b32.xlu0 %v181, 126
    %v403 = vpop.permute.xlu0 %402
    %404 = vrot.lane.b32.xlu0 %v182, 126
    %v405 = vpop.permute.xlu0 %404
    %406 = vrot.lane.b32.xlu0 %v183, 126
    %v407 = vpop.permute.xlu0 %406
    %440 = vrot.lane.b32.xlu0 %v184, 127
    %v441 = vpop.permute.xlu0 %440
    %442 = vrot.lane.b32.xlu0 %v185, 127
    %v443 = vpop.permute.xlu0 %442
    %444 = vrot.lane.b32.xlu0 %v186, 127
    %v445 = vpop.permute.xlu0 %444
    %446 = vrot.lane.b32.xlu0 %v187, 127
    %v447 = vpop.permute.xlu0 %446
    %448 = vrot.lane.b32.xlu0 %v188, 127
    %v449 = vpop.permute.xlu0 %448
    %450 = vrot.lane.b32.xlu0 %v189, 127
    %v451 = vpop.permute.xlu0 %450
    %452 = vrot.lane.b32.xlu0 %v190, 127
    %v453 = vpop.permute.xlu0 %452
    %454 = vrot.lane.b32.xlu0 %v191, 127
    %v455 = vpop.permute.xlu0 %454
    %456 = vrot.lane.b32.xlu0 %v192, 127
    %v457 = vpop.permute.xlu0 %456
    %458 = vrot.lane.b32.xlu0 %v193, 127
    %v459 = vpop.permute.xlu0 %458
    %460 = vrot.lane.b32.xlu0 %v194, 127
    %v461 = vpop.permute.xlu0 %460
    %462 = vrot.lane.b32.xlu0 %v195, 127
    %v463 = vpop.permute.xlu0 %462
    %464 = vrot.lane.b32.xlu0 %v196, 127
    %v465 = vpop.permute.xlu0 %464
    %466 = vrot.lane.b32.xlu0 %v197, 127
    %v467 = vpop.permute.xlu0 %466
    %468 = vrot.lane.b32.xlu0 %v198, 127
    %v469 = vpop.permute.xlu0 %468
    %470 = vrot.lane.b32.xlu0 %v199, 127
    %v471 = vpop.permute.xlu0 %470
    %488 = vrot.lane.b32.xlu0 %v184, 126
    %v489 = vpop.permute.xlu0 %488
    %490 = vrot.lane.b32.xlu0 %v185, 126
    %v491 = vpop.permute.xlu0 %490
    %492 = vrot.lane.b32.xlu0 %v186, 126
    %v493 = vpop.permute.xlu0 %492
    %494 = vrot.lane.b32.xlu0 %v187, 126
    %v495 = vpop.permute.xlu0 %494
    %496 = vrot.lane.b32.xlu0 %v188, 126
    %v497 = vpop.permute.xlu0 %496
    %498 = vrot.lane.b32.xlu0 %v189, 126
    %v499 = vpop.permute.xlu0 %498
    %500 = vrot.lane.b32.xlu0 %v190, 126
    %v501 = vpop.permute.xlu0 %500
    %502 = vrot.lane.b32.xlu0 %v191, 126
    %v503 = vpop.permute.xlu0 %502
    %504 = vrot.lane.b32.xlu0 %v192, 126
    %v505 = vpop.permute.xlu0 %504
    %506 = vrot.lane.b32.xlu0 %v193, 126
    %v507 = vpop.permute.xlu0 %506
    %508 = vrot.lane.b32.xlu0 %v194, 126
    %v509 = vpop.permute.xlu0 %508
    %510 = vrot.lane.b32.xlu0 %v195, 126
    %v511 = vpop.permute.xlu0 %510
    %512 = vrot.lane.b32.xlu0 %v196, 126
    %v513 = vpop.permute.xlu0 %512
    %514 = vrot.lane.b32.xlu0 %v197, 126
    %v515 = vpop.permute.xlu0 %514
    %516 = vrot.lane.b32.xlu0 %v198, 126
    %v517 = vpop.permute.xlu0 %516
    %518 = vrot.lane.b32.xlu0 %v199, 126
    %v519 = vpop.permute.xlu0 %518
    %v536 = vcombine.low %v152, %v156
    %v537 = vcombine.high %v152, %v156
    %v539 = vunpack.c.l.s4 1983009808
    %v540 = vunpack.c.0.s8 %v539
    %v541 = vlaneseq
    %v542 = vshrl.u32 %v541, 7
    %v543 = vsub.s32 %v540, %v542
    %v544 = vrot.slane %v536, %v543
    %v546 = vunpack.c.l.s4 1983009808
    %v547 = vunpack.c.0.s8 %v546
    %v548 = vlaneseq
    %v549 = vshrl.u32 %v548, 7
    %v550 = vsub.s32 %v547, %v549
    %v551 = vrot.slane %v537, %v550
    %v552 = vcombine.low %v154, %v158
    %v553 = vcombine.high %v154, %v158
    %v555 = vunpack.c.l.s4 1983009808
    %v556 = vunpack.c.0.s8 %v555
    %v557 = vlaneseq
    %v558 = vshrl.u32 %v557, 7
    %v559 = vsub.s32 %v556, %v558
    %v560 = vrot.slane %v552, %v559
    %v562 = vunpack.c.l.s4 1983009808
    %v563 = vunpack.c.0.s8 %v562
    %v564 = vlaneseq
    %v565 = vshrl.u32 %v564, 7
    %v566 = vsub.s32 %v563, %v565
    %v567 = vrot.slane %v553, %v566
    %v568 = vcombine.low %v217, %v225
    %v569 = vcombine.high %v217, %v225
    %v571 = vunpack.c.l.s4 1983009808
    %v572 = vunpack.c.0.s8 %v571
    %v573 = vlaneseq
    %v574 = vshrl.u32 %v573, 7
    %v575 = vsub.s32 %v572, %v574
    %v576 = vrot.slane %v568, %v575
    %v578 = vunpack.c.l.s4 1983009808
    %v579 = vunpack.c.0.s8 %v578
    %v580 = vlaneseq
    %v581 = vshrl.u32 %v580, 7
    %v582 = vsub.s32 %v579, %v581
    %v583 = vrot.slane %v569, %v582
    %v584 = vcombine.low %v221, %v229
    %v585 = vcombine.high %v221, %v229
    %v587 = vunpack.c.l.s4 1983009808
    %v588 = vunpack.c.0.s8 %v587
    %v589 = vlaneseq
    %v590 = vshrl.u32 %v589, 7
    %v591 = vsub.s32 %v588, %v590
    %v592 = vrot.slane %v584, %v591
    %v594 = vunpack.c.l.s4 1983009808
    %v595 = vunpack.c.0.s8 %v594
    %v596 = vlaneseq
    %v597 = vshrl.u32 %v596, 7
    %v598 = vsub.s32 %v595, %v597
    %v599 = vrot.slane %v585, %v598
    %v600 = vcombine.low %v544, %v560
    %v601 = vcombine.high %v544, %v560
    %v603 = vunpack.c.l.s4 1934713408
    %v604 = vunpack.c.0.s8 %v603
    %v605 = vlaneseq
    %v606 = vshrl.u32 %v605, 7
    %v607 = vsub.s32 %v604, %v606
    %v608 = vrot.slane %v600, %v607
    %v610 = vunpack.c.l.s4 1934713408
    %v611 = vunpack.c.0.s8 %v610
    %v612 = vlaneseq
    %v613 = vshrl.u32 %v612, 7
    %v614 = vsub.s32 %v611, %v613
    %v615 = vrot.slane %v601, %v614
    %v616 = vcombine.low %v551, %v567
    %v617 = vcombine.high %v551, %v567
    %v619 = vunpack.c.l.s4 1934713408
    %v620 = vunpack.c.0.s8 %v619
    %v621 = vlaneseq
    %v622 = vshrl.u32 %v621, 7
    %v623 = vsub.s32 %v620, %v622
    %v624 = vrot.slane %v616, %v623
    %v626 = vunpack.c.l.s4 1934713408
    %v627 = vunpack.c.0.s8 %v626
    %v628 = vlaneseq
    %v629 = vshrl.u32 %v628, 7
    %v630 = vsub.s32 %v627, %v629
    %v631 = vrot.slane %v617, %v630
    %v632 = vcombine.low %v576, %v592
    %v633 = vcombine.high %v576, %v592
    %v635 = vunpack.c.l.s4 1934713408
    %v636 = vunpack.c.0.s8 %v635
    %v637 = vlaneseq
    %v638 = vshrl.u32 %v637, 7
    %v639 = vsub.s32 %v636, %v638
    %v640 = vrot.slane %v632, %v639
    %v642 = vunpack.c.l.s4 1934713408
    %v643 = vunpack.c.0.s8 %v642
    %v644 = vlaneseq
    %v645 = vshrl.u32 %v644, 7
    %v646 = vsub.s32 %v643, %v645
    %v647 = vrot.slane %v633, %v646
    %v648 = vcombine.low %v583, %v599
    %v649 = vcombine.high %v583, %v599
    %v651 = vunpack.c.l.s4 1934713408
    %v652 = vunpack.c.0.s8 %v651
    %v653 = vlaneseq
    %v654 = vshrl.u32 %v653, 7
    %v655 = vsub.s32 %v652, %v654
    %v656 = vrot.slane %v648, %v655
    %v658 = vunpack.c.l.s4 1934713408
    %v659 = vunpack.c.0.s8 %v658
    %v660 = vlaneseq
    %v661 = vshrl.u32 %v660, 7
    %v662 = vsub.s32 %v659, %v661
    %v663 = vrot.slane %v649, %v662
    %v664 = vcombine.low %v608, %v640
    %v665 = vcombine.high %v608, %v640
    %v666 = vcombine.low %v615, %v647
    %v667 = vcombine.high %v615, %v647
    %v668 = vcombine.low %v624, %v656
    %v669 = vcombine.high %v624, %v656
    %v670 = vcombine.low %v631, %v663
    %v671 = vcombine.high %v631, %v663
    %v672 = vcombine.low %v265, %v273
    %v673 = vcombine.high %v265, %v273
    %v675 = vunpack.c.l.s4 1983009808
    %v676 = vunpack.c.0.s8 %v675
    %v677 = vlaneseq
    %v678 = vshrl.u32 %v677, 7
    %v679 = vsub.s32 %v676, %v678
    %v680 = vrot.slane %v672, %v679
    %v682 = vunpack.c.l.s4 1983009808
    %v683 = vunpack.c.0.s8 %v682
    %v684 = vlaneseq
    %v685 = vshrl.u32 %v684, 7
    %v686 = vsub.s32 %v683, %v685
    %v687 = vrot.slane %v673, %v686
    %v688 = vcombine.low %v269, %v277
    %v689 = vcombine.high %v269, %v277
    %v691 = vunpack.c.l.s4 1983009808
    %v692 = vunpack.c.0.s8 %v691
    %v693 = vlaneseq
    %v694 = vshrl.u32 %v693, 7
    %v695 = vsub.s32 %v692, %v694
    %v696 = vrot.slane %v688, %v695
    %v698 = vunpack.c.l.s4 1983009808
    %v699 = vunpack.c.0.s8 %v698
    %v700 = vlaneseq
    %v701 = vshrl.u32 %v700, 7
    %v702 = vsub.s32 %v699, %v701
    %v703 = vrot.slane %v689, %v702
    %v704 = vcombine.low %v168, %v172
    %v705 = vcombine.high %v168, %v172
    %v707 = vunpack.c.l.s4 1983009808
    %v708 = vunpack.c.0.s8 %v707
    %v709 = vlaneseq
    %v710 = vshrl.u32 %v709, 7
    %v711 = vsub.s32 %v708, %v710
    %v712 = vrot.slane %v704, %v711
    %v714 = vunpack.c.l.s4 1983009808
    %v715 = vunpack.c.0.s8 %v714
    %v716 = vlaneseq
    %v717 = vshrl.u32 %v716, 7
    %v718 = vsub.s32 %v715, %v717
    %v719 = vrot.slane %v705, %v718
    %v720 = vcombine.low %v170, %v174
    %v721 = vcombine.high %v170, %v174
    %v723 = vunpack.c.l.s4 1983009808
    %v724 = vunpack.c.0.s8 %v723
    %v725 = vlaneseq
    %v726 = vshrl.u32 %v725, 7
    %v727 = vsub.s32 %v724, %v726
    %v728 = vrot.slane %v720, %v727
    %v730 = vunpack.c.l.s4 1983009808
    %v731 = vunpack.c.0.s8 %v730
    %v732 = vlaneseq
    %v733 = vshrl.u32 %v732, 7
    %v734 = vsub.s32 %v731, %v733
    %v735 = vrot.slane %v721, %v734
    %v736 = vcombine.low %v680, %v696
    %v737 = vcombine.high %v680, %v696
    %v739 = vunpack.c.l.s4 1934713408
    %v740 = vunpack.c.0.s8 %v739
    %v741 = vlaneseq
    %v742 = vshrl.u32 %v741, 7
    %v743 = vsub.s32 %v740, %v742
    %v744 = vrot.slane %v736, %v743
    %v746 = vunpack.c.l.s4 1934713408
    %v747 = vunpack.c.0.s8 %v746
    %v748 = vlaneseq
    %v749 = vshrl.u32 %v748, 7
    %v750 = vsub.s32 %v747, %v749
    %v751 = vrot.slane %v737, %v750
    %v752 = vcombine.low %v687, %v703
    %v753 = vcombine.high %v687, %v703
    %v755 = vunpack.c.l.s4 1934713408
    %v756 = vunpack.c.0.s8 %v755
    %v757 = vlaneseq
    %v758 = vshrl.u32 %v757, 7
    %v759 = vsub.s32 %v756, %v758
    %v760 = vrot.slane %v752, %v759
    %v762 = vunpack.c.l.s4 1934713408
    %v763 = vunpack.c.0.s8 %v762
    %v764 = vlaneseq
    %v765 = vshrl.u32 %v764, 7
    %v766 = vsub.s32 %v763, %v765
    %v767 = vrot.slane %v753, %v766
    %v768 = vcombine.low %v712, %v728
    %v769 = vcombine.high %v712, %v728
    %v771 = vunpack.c.l.s4 1934713408
    %v772 = vunpack.c.0.s8 %v771
    %v773 = vlaneseq
    %v774 = vshrl.u32 %v773, 7
    %v775 = vsub.s32 %v772, %v774
    %v776 = vrot.slane %v768, %v775
    %v778 = vunpack.c.l.s4 1934713408
    %v779 = vunpack.c.0.s8 %v778
    %v780 = vlaneseq
    %v781 = vshrl.u32 %v780, 7
    %v782 = vsub.s32 %v779, %v781
    %v783 = vrot.slane %v769, %v782
    %v784 = vcombine.low %v719, %v735
    %v785 = vcombine.high %v719, %v735
    %v787 = vunpack.c.l.s4 1934713408
    %v788 = vunpack.c.0.s8 %v787
    %v789 = vlaneseq
    %v790 = vshrl.u32 %v789, 7
    %v791 = vsub.s32 %v788, %v790
    %v792 = vrot.slane %v784, %v791
    %v794 = vunpack.c.l.s4 1934713408
    %v795 = vunpack.c.0.s8 %v794
    %v796 = vlaneseq
    %v797 = vshrl.u32 %v796, 7
    %v798 = vsub.s32 %v795, %v797
    %v799 = vrot.slane %v785, %v798
    %v800 = vcombine.low %v744, %v776
    %v801 = vcombine.high %v744, %v776
    %v802 = vcombine.low %v751, %v783
    %v803 = vcombine.high %v751, %v783
    %v804 = vcombine.low %v760, %v792
    %v805 = vcombine.high %v760, %v792
    %v806 = vcombine.low %v767, %v799
    %v807 = vcombine.high %v767, %v799
    %v808 = vcombine.low %v329, %v337
    %v809 = vcombine.high %v329, %v337
    %v811 = vunpack.c.l.s4 1983009808
    %v812 = vunpack.c.0.s8 %v811
    %v813 = vlaneseq
    %v814 = vshrl.u32 %v813, 7
    %v815 = vsub.s32 %v812, %v814
    %v816 = vrot.slane %v808, %v815
    %v818 = vunpack.c.l.s4 1983009808
    %v819 = vunpack.c.0.s8 %v818
    %v820 = vlaneseq
    %v821 = vshrl.u32 %v820, 7
    %v822 = vsub.s32 %v819, %v821
    %v823 = vrot.slane %v809, %v822
    %v824 = vcombine.low %v333, %v341
    %v825 = vcombine.high %v333, %v341
    %v827 = vunpack.c.l.s4 1983009808
    %v828 = vunpack.c.0.s8 %v827
    %v829 = vlaneseq
    %v830 = vshrl.u32 %v829, 7
    %v831 = vsub.s32 %v828, %v830
    %v832 = vrot.slane %v824, %v831
    %v834 = vunpack.c.l.s4 1983009808
    %v835 = vunpack.c.0.s8 %v834
    %v836 = vlaneseq
    %v837 = vshrl.u32 %v836, 7
    %v838 = vsub.s32 %v835, %v837
    %v839 = vrot.slane %v825, %v838
    %v840 = vcombine.low %v377, %v385
    %v841 = vcombine.high %v377, %v385
    %v843 = vunpack.c.l.s4 1983009808
    %v844 = vunpack.c.0.s8 %v843
    %v845 = vlaneseq
    %v846 = vshrl.u32 %v845, 7
    %v847 = vsub.s32 %v844, %v846
    %v848 = vrot.slane %v840, %v847
    %v850 = vunpack.c.l.s4 1983009808
    %v851 = vunpack.c.0.s8 %v850
    %v852 = vlaneseq
    %v853 = vshrl.u32 %v852, 7
    %v854 = vsub.s32 %v851, %v853
    %v855 = vrot.slane %v841, %v854
    %v856 = vcombine.low %v381, %v389
    %v857 = vcombine.high %v381, %v389
    %v859 = vunpack.c.l.s4 1983009808
    %v860 = vunpack.c.0.s8 %v859
    %v861 = vlaneseq
    %v862 = vshrl.u32 %v861, 7
    %v863 = vsub.s32 %v860, %v862
    %v864 = vrot.slane %v856, %v863
    %v866 = vunpack.c.l.s4 1983009808
    %v867 = vunpack.c.0.s8 %v866
    %v868 = vlaneseq
    %v869 = vshrl.u32 %v868, 7
    %v870 = vsub.s32 %v867, %v869
    %v871 = vrot.slane %v857, %v870
    %v872 = vcombine.low %v816, %v832
    %v873 = vcombine.high %v816, %v832
    %v875 = vunpack.c.l.s4 1934713408
    %v876 = vunpack.c.0.s8 %v875
    %v877 = vlaneseq
    %v878 = vshrl.u32 %v877, 7
    %v879 = vsub.s32 %v876, %v878
    %v880 = vrot.slane %v872, %v879
    %v882 = vunpack.c.l.s4 1934713408
    %v883 = vunpack.c.0.s8 %v882
    %v884 = vlaneseq
    %v885 = vshrl.u32 %v884, 7
    %v886 = vsub.s32 %v883, %v885
    %v887 = vrot.slane %v873, %v886
    %v888 = vcombine.low %v823, %v839
    %v889 = vcombine.high %v823, %v839
    %v891 = vunpack.c.l.s4 1934713408
    %v892 = vunpack.c.0.s8 %v891
    %v893 = vlaneseq
    %v894 = vshrl.u32 %v893, 7
    %v895 = vsub.s32 %v892, %v894
    %v896 = vrot.slane %v888, %v895
    %v898 = vunpack.c.l.s4 1934713408
    %v899 = vunpack.c.0.s8 %v898
    %v900 = vlaneseq
    %v901 = vshrl.u32 %v900, 7
    %v902 = vsub.s32 %v899, %v901
    %v903 = vrot.slane %v889, %v902
    %v904 = vcombine.low %v848, %v864
    %v905 = vcombine.high %v848, %v864
    %v907 = vunpack.c.l.s4 1934713408
    %v908 = vunpack.c.0.s8 %v907
    %v909 = vlaneseq
    %v910 = vshrl.u32 %v909, 7
    %v911 = vsub.s32 %v908, %v910
    %v912 = vrot.slane %v904, %v911
    %v914 = vunpack.c.l.s4 1934713408
    %v915 = vunpack.c.0.s8 %v914
    %v916 = vlaneseq
    %v917 = vshrl.u32 %v916, 7
    %v918 = vsub.s32 %v915, %v917
    %v919 = vrot.slane %v905, %v918
    %v920 = vcombine.low %v855, %v871
    %v921 = vcombine.high %v855, %v871
    %v923 = vunpack.c.l.s4 1934713408
    %v924 = vunpack.c.0.s8 %v923
    %v925 = vlaneseq
    %v926 = vshrl.u32 %v925, 7
    %v927 = vsub.s32 %v924, %v926
    %v928 = vrot.slane %v920, %v927
    %v930 = vunpack.c.l.s4 1934713408
    %v931 = vunpack.c.0.s8 %v930
    %v932 = vlaneseq
    %v933 = vshrl.u32 %v932, 7
    %v934 = vsub.s32 %v931, %v933
    %v935 = vrot.slane %v921, %v934
    %v936 = vcombine.low %v880, %v912
    %v937 = vcombine.high %v880, %v912
    %v938 = vcombine.low %v887, %v919
    %v939 = vcombine.high %v887, %v919
    %v940 = vcombine.low %v896, %v928
    %v941 = vcombine.high %v896, %v928
    %v942 = vcombine.low %v903, %v935
    %v943 = vcombine.high %v903, %v935
    %v944 = vcombine.low %v184, %v188
    %v945 = vcombine.high %v184, %v188
    %v947 = vunpack.c.l.s4 1983009808
    %v948 = vunpack.c.0.s8 %v947
    %v949 = vlaneseq
    %v950 = vshrl.u32 %v949, 7
    %v951 = vsub.s32 %v948, %v950
    %v952 = vrot.slane %v944, %v951
    %v954 = vunpack.c.l.s4 1983009808
    %v955 = vunpack.c.0.s8 %v954
    %v956 = vlaneseq
    %v957 = vshrl.u32 %v956, 7
    %v958 = vsub.s32 %v955, %v957
    %v959 = vrot.slane %v945, %v958
    %v960 = vcombine.low %v186, %v190
    %v961 = vcombine.high %v186, %v190
    %v963 = vunpack.c.l.s4 1983009808
    %v964 = vunpack.c.0.s8 %v963
    %v965 = vlaneseq
    %v966 = vshrl.u32 %v965, 7
    %v967 = vsub.s32 %v964, %v966
    %v968 = vrot.slane %v960, %v967
    %v970 = vunpack.c.l.s4 1983009808
    %v971 = vunpack.c.0.s8 %v970
    %v972 = vlaneseq
    %v973 = vshrl.u32 %v972, 7
    %v974 = vsub.s32 %v971, %v973
    %v975 = vrot.slane %v961, %v974
    %v976 = vcombine.low %v441, %v449
    %v977 = vcombine.high %v441, %v449
    %v979 = vunpack.c.l.s4 1983009808
    %v980 = vunpack.c.0.s8 %v979
    %v981 = vlaneseq
    %v982 = vshrl.u32 %v981, 7
    %v983 = vsub.s32 %v980, %v982
    %v984 = vrot.slane %v976, %v983
    %v986 = vunpack.c.l.s4 1983009808
    %v987 = vunpack.c.0.s8 %v986
    %v988 = vlaneseq
    %v989 = vshrl.u32 %v988, 7
    %v990 = vsub.s32 %v987, %v989
    %v991 = vrot.slane %v977, %v990
    %v992 = vcombine.low %v445, %v453
    %v993 = vcombine.high %v445, %v453
    %v995 = vunpack.c.l.s4 1983009808
    %v996 = vunpack.c.0.s8 %v995
    %v997 = vlaneseq
    %v998 = vshrl.u32 %v997, 7
    %v999 = vsub.s32 %v996, %v998
    %v1000 = vrot.slane %v992, %v999
    %v1002 = vunpack.c.l.s4 1983009808
    %v1003 = vunpack.c.0.s8 %v1002
    %v1004 = vlaneseq
    %v1005 = vshrl.u32 %v1004, 7
    %v1006 = vsub.s32 %v1003, %v1005
    %v1007 = vrot.slane %v993, %v1006
    %v1008 = vcombine.low %v952, %v968
    %v1009 = vcombine.high %v952, %v968
    %v1011 = vunpack.c.l.s4 1934713408
    %v1012 = vunpack.c.0.s8 %v1011
    %v1013 = vlaneseq
    %v1014 = vshrl.u32 %v1013, 7
    %v1015 = vsub.s32 %v1012, %v1014
    %v1016 = vrot.slane %v1008, %v1015
    %v1018 = vunpack.c.l.s4 1934713408
    %v1019 = vunpack.c.0.s8 %v1018
    %v1020 = vlaneseq
    %v1021 = vshrl.u32 %v1020, 7
    %v1022 = vsub.s32 %v1019, %v1021
    %v1023 = vrot.slane %v1009, %v1022
    %v1024 = vcombine.low %v959, %v975
    %v1025 = vcombine.high %v959, %v975
    %v1027 = vunpack.c.l.s4 1934713408
    %v1028 = vunpack.c.0.s8 %v1027
    %v1029 = vlaneseq
    %v1030 = vshrl.u32 %v1029, 7
    %v1031 = vsub.s32 %v1028, %v1030
    %v1032 = vrot.slane %v1024, %v1031
    %v1034 = vunpack.c.l.s4 1934713408
    %v1035 = vunpack.c.0.s8 %v1034
    %v1036 = vlaneseq
    %v1037 = vshrl.u32 %v1036, 7
    %v1038 = vsub.s32 %v1035, %v1037
    %v1039 = vrot.slane %v1025, %v1038
    %v1040 = vcombine.low %v984, %v1000
    %v1041 = vcombine.high %v984, %v1000
    %v1043 = vunpack.c.l.s4 1934713408
    %v1044 = vunpack.c.0.s8 %v1043
    %v1045 = vlaneseq
    %v1046 = vshrl.u32 %v1045, 7
    %v1047 = vsub.s32 %v1044, %v1046
    %v1048 = vrot.slane %v1040, %v1047
    %v1050 = vunpack.c.l.s4 1934713408
    %v1051 = vunpack.c.0.s8 %v1050
    %v1052 = vlaneseq
    %v1053 = vshrl.u32 %v1052, 7
    %v1054 = vsub.s32 %v1051, %v1053
    %v1055 = vrot.slane %v1041, %v1054
    %v1056 = vcombine.low %v991, %v1007
    %v1057 = vcombine.high %v991, %v1007
    %v1059 = vunpack.c.l.s4 1934713408
    %v1060 = vunpack.c.0.s8 %v1059
    %v1061 = vlaneseq
    %v1062 = vshrl.u32 %v1061, 7
    %v1063 = vsub.s32 %v1060, %v1062
    %v1064 = vrot.slane %v1056, %v1063
    %v1066 = vunpack.c.l.s4 1934713408
    %v1067 = vunpack.c.0.s8 %v1066
    %v1068 = vlaneseq
    %v1069 = vshrl.u32 %v1068, 7
    %v1070 = vsub.s32 %v1067, %v1069
    %v1071 = vrot.slane %v1057, %v1070
    %v1072 = vcombine.low %v1016, %v1048
    %v1073 = vcombine.high %v1016, %v1048
    %v1074 = vcombine.low %v1023, %v1055
    %v1075 = vcombine.high %v1023, %v1055
    %v1076 = vcombine.low %v1032, %v1064
    %v1077 = vcombine.high %v1032, %v1064
    %v1078 = vcombine.low %v1039, %v1071
    %v1079 = vcombine.high %v1039, %v1071
    %v1080 = vcombine.low %v489, %v497
    %v1081 = vcombine.high %v489, %v497
    %v1083 = vunpack.c.l.s4 1983009808
    %v1084 = vunpack.c.0.s8 %v1083
    %v1085 = vlaneseq
    %v1086 = vshrl.u32 %v1085, 7
    %v1087 = vsub.s32 %v1084, %v1086
    %v1088 = vrot.slane %v1080, %v1087
    %v1090 = vunpack.c.l.s4 1983009808
    %v1091 = vunpack.c.0.s8 %v1090
    %v1092 = vlaneseq
    %v1093 = vshrl.u32 %v1092, 7
    %v1094 = vsub.s32 %v1091, %v1093
    %v1095 = vrot.slane %v1081, %v1094
    %v1096 = vcombine.low %v493, %v501
    %v1097 = vcombine.high %v493, %v501
    %v1099 = vunpack.c.l.s4 1983009808
    %v1100 = vunpack.c.0.s8 %v1099
    %v1101 = vlaneseq
    %v1102 = vshrl.u32 %v1101, 7
    %v1103 = vsub.s32 %v1100, %v1102
    %v1104 = vrot.slane %v1096, %v1103
    %v1106 = vunpack.c.l.s4 1983009808
    %v1107 = vunpack.c.0.s8 %v1106
    %v1108 = vlaneseq
    %v1109 = vshrl.u32 %v1108, 7
    %v1110 = vsub.s32 %v1107, %v1109
    %v1111 = vrot.slane %v1097, %v1110
    %v1112 = vcombine.low %v1088, %v1104
    %v1113 = vcombine.high %v1088, %v1104
    %v1115 = vunpack.c.l.s4 1934713408
    %v1116 = vunpack.c.0.s8 %v1115
    %v1117 = vlaneseq
    %v1118 = vshrl.u32 %v1117, 7
    %v1119 = vsub.s32 %v1116, %v1118
    %v1120 = vrot.slane %v1112, %v1119
    %v1122 = vunpack.c.l.s4 1934713408
    %v1123 = vunpack.c.0.s8 %v1122
    %v1124 = vlaneseq
    %v1125 = vshrl.u32 %v1124, 7
    %v1126 = vsub.s32 %v1123, %v1125
    %v1127 = vrot.slane %v1113, %v1126
    %v1128 = vcombine.low %v1095, %v1111
    %v1129 = vcombine.high %v1095, %v1111
    %v1131 = vunpack.c.l.s4 1934713408
    %v1132 = vunpack.c.0.s8 %v1131
    %v1133 = vlaneseq
    %v1134 = vshrl.u32 %v1133, 7
    %v1135 = vsub.s32 %v1132, %v1134
    %v1136 = vrot.slane %v1128, %v1135
    %v1138 = vunpack.c.l.s4 1934713408
    %v1139 = vunpack.c.0.s8 %v1138
    %v1140 = vlaneseq
    %v1141 = vshrl.u32 %v1140, 7
    %v1142 = vsub.s32 %v1139, %v1141
    %v1143 = vrot.slane %v1129, %v1142
    %v1144 = vcombine.high %v1120, 0.0
    %v1145 = vcombine.high %v1127, 0.0
    %v1146 = vcombine.high %v1136, 0.0
    %v1147 = vcombine.high %v1143, 0.0
    %v1148 = vcombine.low %v153, %v157
    %v1149 = vcombine.high %v153, %v157
    %v1151 = vunpack.c.l.s4 1983009808
    %v1152 = vunpack.c.0.s8 %v1151
    %v1153 = vlaneseq
    %v1154 = vshrl.u32 %v1153, 7
    %v1155 = vsub.s32 %v1152, %v1154
    %v1156 = vrot.slane %v1148, %v1155
    %v1158 = vunpack.c.l.s4 1983009808
    %v1159 = vunpack.c.0.s8 %v1158
    %v1160 = vlaneseq
    %v1161 = vshrl.u32 %v1160, 7
    %v1162 = vsub.s32 %v1159, %v1161
    %v1163 = vrot.slane %v1149, %v1162
    %v1164 = vcombine.low %v155, %v159
    %v1165 = vcombine.high %v155, %v159
    %v1167 = vunpack.c.l.s4 1983009808
    %v1168 = vunpack.c.0.s8 %v1167
    %v1169 = vlaneseq
    %v1170 = vshrl.u32 %v1169, 7
    %v1171 = vsub.s32 %v1168, %v1170
    %v1172 = vrot.slane %v1164, %v1171
    %v1174 = vunpack.c.l.s4 1983009808
    %v1175 = vunpack.c.0.s8 %v1174
    %v1176 = vlaneseq
    %v1177 = vshrl.u32 %v1176, 7
    %v1178 = vsub.s32 %v1175, %v1177
    %v1179 = vrot.slane %v1165, %v1178
    %v1180 = vcombine.low %v219, %v227
    %v1181 = vcombine.high %v219, %v227
    %v1183 = vunpack.c.l.s4 1983009808
    %v1184 = vunpack.c.0.s8 %v1183
    %v1185 = vlaneseq
    %v1186 = vshrl.u32 %v1185, 7
    %v1187 = vsub.s32 %v1184, %v1186
    %v1188 = vrot.slane %v1180, %v1187
    %v1190 = vunpack.c.l.s4 1983009808
    %v1191 = vunpack.c.0.s8 %v1190
    %v1192 = vlaneseq
    %v1193 = vshrl.u32 %v1192, 7
    %v1194 = vsub.s32 %v1191, %v1193
    %v1195 = vrot.slane %v1181, %v1194
    %v1196 = vcombine.low %v223, %v231
    %v1197 = vcombine.high %v223, %v231
    %v1199 = vunpack.c.l.s4 1983009808
    %v1200 = vunpack.c.0.s8 %v1199
    %v1201 = vlaneseq
    %v1202 = vshrl.u32 %v1201, 7
    %v1203 = vsub.s32 %v1200, %v1202
    %v1204 = vrot.slane %v1196, %v1203
    %v1206 = vunpack.c.l.s4 1983009808
    %v1207 = vunpack.c.0.s8 %v1206
    %v1208 = vlaneseq
    %v1209 = vshrl.u32 %v1208, 7
    %v1210 = vsub.s32 %v1207, %v1209
    %v1211 = vrot.slane %v1197, %v1210
    %v1212 = vcombine.low %v1156, %v1172
    %v1213 = vcombine.high %v1156, %v1172
    %v1215 = vunpack.c.l.s4 1934713408
    %v1216 = vunpack.c.0.s8 %v1215
    %v1217 = vlaneseq
    %v1218 = vshrl.u32 %v1217, 7
    %v1219 = vsub.s32 %v1216, %v1218
    %v1220 = vrot.slane %v1212, %v1219
    %v1222 = vunpack.c.l.s4 1934713408
    %v1223 = vunpack.c.0.s8 %v1222
    %v1224 = vlaneseq
    %v1225 = vshrl.u32 %v1224, 7
    %v1226 = vsub.s32 %v1223, %v1225
    %v1227 = vrot.slane %v1213, %v1226
    %v1228 = vcombine.low %v1163, %v1179
    %v1229 = vcombine.high %v1163, %v1179
    %v1231 = vunpack.c.l.s4 1934713408
    %v1232 = vunpack.c.0.s8 %v1231
    %v1233 = vlaneseq
    %v1234 = vshrl.u32 %v1233, 7
    %v1235 = vsub.s32 %v1232, %v1234
    %v1236 = vrot.slane %v1228, %v1235
    %v1238 = vunpack.c.l.s4 1934713408
    %v1239 = vunpack.c.0.s8 %v1238
    %v1240 = vlaneseq
    %v1241 = vshrl.u32 %v1240, 7
    %v1242 = vsub.s32 %v1239, %v1241
    %v1243 = vrot.slane %v1229, %v1242
    %v1244 = vcombine.low %v1188, %v1204
    %v1245 = vcombine.high %v1188, %v1204
    %v1247 = vunpack.c.l.s4 1934713408
    %v1248 = vunpack.c.0.s8 %v1247
    %v1249 = vlaneseq
    %v1250 = vshrl.u32 %v1249, 7
    %v1251 = vsub.s32 %v1248, %v1250
    %v1252 = vrot.slane %v1244, %v1251
    %v1254 = vunpack.c.l.s4 1934713408
    %v1255 = vunpack.c.0.s8 %v1254
    %v1256 = vlaneseq
    %v1257 = vshrl.u32 %v1256, 7
    %v1258 = vsub.s32 %v1255, %v1257
    %v1259 = vrot.slane %v1245, %v1258
    %v1260 = vcombine.low %v1195, %v1211
    %v1261 = vcombine.high %v1195, %v1211
    %v1263 = vunpack.c.l.s4 1934713408
    %v1264 = vunpack.c.0.s8 %v1263
    %v1265 = vlaneseq
    %v1266 = vshrl.u32 %v1265, 7
    %v1267 = vsub.s32 %v1264, %v1266
    %v1268 = vrot.slane %v1260, %v1267
    %v1270 = vunpack.c.l.s4 1934713408
    %v1271 = vunpack.c.0.s8 %v1270
    %v1272 = vlaneseq
    %v1273 = vshrl.u32 %v1272, 7
    %v1274 = vsub.s32 %v1271, %v1273
    %v1275 = vrot.slane %v1261, %v1274
    %v1276 = vcombine.low %v1220, %v1252
    %v1277 = vcombine.high %v1220, %v1252
    %v1278 = vcombine.low %v1227, %v1259
    %v1279 = vcombine.high %v1227, %v1259
    %v1280 = vcombine.low %v1236, %v1268
    %v1281 = vcombine.high %v1236, %v1268
    %v1282 = vcombine.low %v1243, %v1275
    %v1283 = vcombine.high %v1243, %v1275
    %v1284 = vcombine.low %v267, %v275
    %v1285 = vcombine.high %v267, %v275
    %v1287 = vunpack.c.l.s4 1983009808
    %v1288 = vunpack.c.0.s8 %v1287
    %v1289 = vlaneseq
    %v1290 = vshrl.u32 %v1289, 7
    %v1291 = vsub.s32 %v1288, %v1290
    %v1292 = vrot.slane %v1284, %v1291
    %v1294 = vunpack.c.l.s4 1983009808
    %v1295 = vunpack.c.0.s8 %v1294
    %v1296 = vlaneseq
    %v1297 = vshrl.u32 %v1296, 7
    %v1298 = vsub.s32 %v1295, %v1297
    %v1299 = vrot.slane %v1285, %v1298
    %v1300 = vcombine.low %v271, %v279
    %v1301 = vcombine.high %v271, %v279
    %v1303 = vunpack.c.l.s4 1983009808
    %v1304 = vunpack.c.0.s8 %v1303
    %v1305 = vlaneseq
    %v1306 = vshrl.u32 %v1305, 7
    %v1307 = vsub.s32 %v1304, %v1306
    %v1308 = vrot.slane %v1300, %v1307
    %v1310 = vunpack.c.l.s4 1983009808
    %v1311 = vunpack.c.0.s8 %v1310
    %v1312 = vlaneseq
    %v1313 = vshrl.u32 %v1312, 7
    %v1314 = vsub.s32 %v1311, %v1313
    %v1315 = vrot.slane %v1301, %v1314
    %v1316 = vcombine.low %v169, %v173
    %v1317 = vcombine.high %v169, %v173
    %v1319 = vunpack.c.l.s4 1983009808
    %v1320 = vunpack.c.0.s8 %v1319
    %v1321 = vlaneseq
    %v1322 = vshrl.u32 %v1321, 7
    %v1323 = vsub.s32 %v1320, %v1322
    %v1324 = vrot.slane %v1316, %v1323
    %v1326 = vunpack.c.l.s4 1983009808
    %v1327 = vunpack.c.0.s8 %v1326
    %v1328 = vlaneseq
    %v1329 = vshrl.u32 %v1328, 7
    %v1330 = vsub.s32 %v1327, %v1329
    %v1331 = vrot.slane %v1317, %v1330
    %v1332 = vcombine.low %v171, %v175
    %v1333 = vcombine.high %v171, %v175
    %v1335 = vunpack.c.l.s4 1983009808
    %v1336 = vunpack.c.0.s8 %v1335
    %v1337 = vlaneseq
    %v1338 = vshrl.u32 %v1337, 7
    %v1339 = vsub.s32 %v1336, %v1338
    %v1340 = vrot.slane %v1332, %v1339
    %v1342 = vunpack.c.l.s4 1983009808
    %v1343 = vunpack.c.0.s8 %v1342
    %v1344 = vlaneseq
    %v1345 = vshrl.u32 %v1344, 7
    %v1346 = vsub.s32 %v1343, %v1345
    %v1347 = vrot.slane %v1333, %v1346
    %v1348 = vcombine.low %v1292, %v1308
    %v1349 = vcombine.high %v1292, %v1308
    %v1351 = vunpack.c.l.s4 1934713408
    %v1352 = vunpack.c.0.s8 %v1351
    %v1353 = vlaneseq
    %v1354 = vshrl.u32 %v1353, 7
    %v1355 = vsub.s32 %v1352, %v1354
    %v1356 = vrot.slane %v1348, %v1355
    %v1358 = vunpack.c.l.s4 1934713408
    %v1359 = vunpack.c.0.s8 %v1358
    %v1360 = vlaneseq
    %v1361 = vshrl.u32 %v1360, 7
    %v1362 = vsub.s32 %v1359, %v1361
    %v1363 = vrot.slane %v1349, %v1362
    %v1364 = vcombine.low %v1299, %v1315
    %v1365 = vcombine.high %v1299, %v1315
    %v1367 = vunpack.c.l.s4 1934713408
    %v1368 = vunpack.c.0.s8 %v1367
    %v1369 = vlaneseq
    %v1370 = vshrl.u32 %v1369, 7
    %v1371 = vsub.s32 %v1368, %v1370
    %v1372 = vrot.slane %v1364, %v1371
    %v1374 = vunpack.c.l.s4 1934713408
    %v1375 = vunpack.c.0.s8 %v1374
    %v1376 = vlaneseq
    %v1377 = vshrl.u32 %v1376, 7
    %v1378 = vsub.s32 %v1375, %v1377
    %v1379 = vrot.slane %v1365, %v1378
    %v1380 = vcombine.low %v1324, %v1340
    %v1381 = vcombine.high %v1324, %v1340
    %v1383 = vunpack.c.l.s4 1934713408
    %v1384 = vunpack.c.0.s8 %v1383
    %v1385 = vlaneseq
    %v1386 = vshrl.u32 %v1385, 7
    %v1387 = vsub.s32 %v1384, %v1386
    %v1388 = vrot.slane %v1380, %v1387
    %v1390 = vunpack.c.l.s4 1934713408
    %v1391 = vunpack.c.0.s8 %v1390
    %v1392 = vlaneseq
    %v1393 = vshrl.u32 %v1392, 7
    %v1394 = vsub.s32 %v1391, %v1393
    %v1395 = vrot.slane %v1381, %v1394
    %v1396 = vcombine.low %v1331, %v1347
    %v1397 = vcombine.high %v1331, %v1347
    %v1399 = vunpack.c.l.s4 1934713408
    %v1400 = vunpack.c.0.s8 %v1399
    %v1401 = vlaneseq
    %v1402 = vshrl.u32 %v1401, 7
    %v1403 = vsub.s32 %v1400, %v1402
    %v1404 = vrot.slane %v1396, %v1403
    %v1406 = vunpack.c.l.s4 1934713408
    %v1407 = vunpack.c.0.s8 %v1406
    %v1408 = vlaneseq
    %v1409 = vshrl.u32 %v1408, 7
    %v1410 = vsub.s32 %v1407, %v1409
    %v1411 = vrot.slane %v1397, %v1410
    %v1412 = vcombine.low %v1356, %v1388
    %v1413 = vcombine.high %v1356, %v1388
    %v1414 = vcombine.low %v1363, %v1395
    %v1415 = vcombine.high %v1363, %v1395
    %v1416 = vcombine.low %v1372, %v1404
    %v1417 = vcombine.high %v1372, %v1404
    %v1418 = vcombine.low %v1379, %v1411
    %v1419 = vcombine.high %v1379, %v1411
    %v1420 = vcombine.low %v331, %v339
    %v1421 = vcombine.high %v331, %v339
    %v1423 = vunpack.c.l.s4 1983009808
    %v1424 = vunpack.c.0.s8 %v1423
    %v1425 = vlaneseq
    %v1426 = vshrl.u32 %v1425, 7
    %v1427 = vsub.s32 %v1424, %v1426
    %v1428 = vrot.slane %v1420, %v1427
    %v1430 = vunpack.c.l.s4 1983009808
    %v1431 = vunpack.c.0.s8 %v1430
    %v1432 = vlaneseq
    %v1433 = vshrl.u32 %v1432, 7
    %v1434 = vsub.s32 %v1431, %v1433
    %v1435 = vrot.slane %v1421, %v1434
    %v1436 = vcombine.low %v335, %v343
    %v1437 = vcombine.high %v335, %v343
    %v1439 = vunpack.c.l.s4 1983009808
    %v1440 = vunpack.c.0.s8 %v1439
    %v1441 = vlaneseq
    %v1442 = vshrl.u32 %v1441, 7
    %v1443 = vsub.s32 %v1440, %v1442
    %v1444 = vrot.slane %v1436, %v1443
    %v1446 = vunpack.c.l.s4 1983009808
    %v1447 = vunpack.c.0.s8 %v1446
    %v1448 = vlaneseq
    %v1449 = vshrl.u32 %v1448, 7
    %v1450 = vsub.s32 %v1447, %v1449
    %v1451 = vrot.slane %v1437, %v1450
    %v1452 = vcombine.low %v379, %v387
    %v1453 = vcombine.high %v379, %v387
    %v1455 = vunpack.c.l.s4 1983009808
    %v1456 = vunpack.c.0.s8 %v1455
    %v1457 = vlaneseq
    %v1458 = vshrl.u32 %v1457, 7
    %v1459 = vsub.s32 %v1456, %v1458
    %v1460 = vrot.slane %v1452, %v1459
    %v1462 = vunpack.c.l.s4 1983009808
    %v1463 = vunpack.c.0.s8 %v1462
    %v1464 = vlaneseq
    %v1465 = vshrl.u32 %v1464, 7
    %v1466 = vsub.s32 %v1463, %v1465
    %v1467 = vrot.slane %v1453, %v1466
    %v1468 = vcombine.low %v383, %v391
    %v1469 = vcombine.high %v383, %v391
    %v1471 = vunpack.c.l.s4 1983009808
    %v1472 = vunpack.c.0.s8 %v1471
    %v1473 = vlaneseq
    %v1474 = vshrl.u32 %v1473, 7
    %v1475 = vsub.s32 %v1472, %v1474
    %v1476 = vrot.slane %v1468, %v1475
    %v1478 = vunpack.c.l.s4 1983009808
    %v1479 = vunpack.c.0.s8 %v1478
    %v1480 = vlaneseq
    %v1481 = vshrl.u32 %v1480, 7
    %v1482 = vsub.s32 %v1479, %v1481
    %v1483 = vrot.slane %v1469, %v1482
    %v1484 = vcombine.low %v1428, %v1444
    %v1485 = vcombine.high %v1428, %v1444
    %v1487 = vunpack.c.l.s4 1934713408
    %v1488 = vunpack.c.0.s8 %v1487
    %v1489 = vlaneseq
    %v1490 = vshrl.u32 %v1489, 7
    %v1491 = vsub.s32 %v1488, %v1490
    %v1492 = vrot.slane %v1484, %v1491
    %v1494 = vunpack.c.l.s4 1934713408
    %v1495 = vunpack.c.0.s8 %v1494
    %v1496 = vlaneseq
    %v1497 = vshrl.u32 %v1496, 7
    %v1498 = vsub.s32 %v1495, %v1497
    %v1499 = vrot.slane %v1485, %v1498
    %v1500 = vcombine.low %v1435, %v1451
    %v1501 = vcombine.high %v1435, %v1451
    %v1503 = vunpack.c.l.s4 1934713408
    %v1504 = vunpack.c.0.s8 %v1503
    %v1505 = vlaneseq
    %v1506 = vshrl.u32 %v1505, 7
    %v1507 = vsub.s32 %v1504, %v1506
    %v1508 = vrot.slane %v1500, %v1507
    %v1510 = vunpack.c.l.s4 1934713408
    %v1511 = vunpack.c.0.s8 %v1510
    %v1512 = vlaneseq
    %v1513 = vshrl.u32 %v1512, 7
    %v1514 = vsub.s32 %v1511, %v1513
    %v1515 = vrot.slane %v1501, %v1514
    %v1516 = vcombine.low %v1460, %v1476
    %v1517 = vcombine.high %v1460, %v1476
    %v1519 = vunpack.c.l.s4 1934713408
    %v1520 = vunpack.c.0.s8 %v1519
    %v1521 = vlaneseq
    %v1522 = vshrl.u32 %v1521, 7
    %v1523 = vsub.s32 %v1520, %v1522
    %v1524 = vrot.slane %v1516, %v1523
    %v1526 = vunpack.c.l.s4 1934713408
    %v1527 = vunpack.c.0.s8 %v1526
    %v1528 = vlaneseq
    %v1529 = vshrl.u32 %v1528, 7
    %v1530 = vsub.s32 %v1527, %v1529
    %v1531 = vrot.slane %v1517, %v1530
    %v1532 = vcombine.low %v1467, %v1483
    %v1533 = vcombine.high %v1467, %v1483
    %v1535 = vunpack.c.l.s4 1934713408
    %v1536 = vunpack.c.0.s8 %v1535
    %v1537 = vlaneseq
    %v1538 = vshrl.u32 %v1537, 7
    %v1539 = vsub.s32 %v1536, %v1538
    %v1540 = vrot.slane %v1532, %v1539
    %v1542 = vunpack.c.l.s4 1934713408
    %v1543 = vunpack.c.0.s8 %v1542
    %v1544 = vlaneseq
    %v1545 = vshrl.u32 %v1544, 7
    %v1546 = vsub.s32 %v1543, %v1545
    %v1547 = vrot.slane %v1533, %v1546
    %v1548 = vcombine.low %v1492, %v1524
    %v1549 = vcombine.high %v1492, %v1524
    %v1550 = vcombine.low %v1499, %v1531
    %v1551 = vcombine.high %v1499, %v1531
    %v1552 = vcombine.low %v1508, %v1540
    %v1553 = vcombine.high %v1508, %v1540
    %v1554 = vcombine.low %v1515, %v1547
    %v1555 = vcombine.high %v1515, %v1547
    %v1556 = vcombine.low %v185, %v189
    %v1557 = vcombine.high %v185, %v189
    %v1559 = vunpack.c.l.s4 1983009808
    %v1560 = vunpack.c.0.s8 %v1559
    %v1561 = vlaneseq
    %v1562 = vshrl.u32 %v1561, 7
    %v1563 = vsub.s32 %v1560, %v1562
    %v1564 = vrot.slane %v1556, %v1563
    %v1566 = vunpack.c.l.s4 1983009808
    %v1567 = vunpack.c.0.s8 %v1566
    %v1568 = vlaneseq
    %v1569 = vshrl.u32 %v1568, 7
    %v1570 = vsub.s32 %v1567, %v1569
    %v1571 = vrot.slane %v1557, %v1570
    %v1572 = vcombine.low %v187, %v191
    %v1573 = vcombine.high %v187, %v191
    %v1575 = vunpack.c.l.s4 1983009808
    %v1576 = vunpack.c.0.s8 %v1575
    %v1577 = vlaneseq
    %v1578 = vshrl.u32 %v1577, 7
    %v1579 = vsub.s32 %v1576, %v1578
    %v1580 = vrot.slane %v1572, %v1579
    %v1582 = vunpack.c.l.s4 1983009808
    %v1583 = vunpack.c.0.s8 %v1582
    %v1584 = vlaneseq
    %v1585 = vshrl.u32 %v1584, 7
    %v1586 = vsub.s32 %v1583, %v1585
    %v1587 = vrot.slane %v1573, %v1586
    %v1588 = vcombine.low %v443, %v451
    %v1589 = vcombine.high %v443, %v451
    %v1591 = vunpack.c.l.s4 1983009808
    %v1592 = vunpack.c.0.s8 %v1591
    %v1593 = vlaneseq
    %v1594 = vshrl.u32 %v1593, 7
    %v1595 = vsub.s32 %v1592, %v1594
    %v1596 = vrot.slane %v1588, %v1595
    %v1598 = vunpack.c.l.s4 1983009808
    %v1599 = vunpack.c.0.s8 %v1598
    %v1600 = vlaneseq
    %v1601 = vshrl.u32 %v1600, 7
    %v1602 = vsub.s32 %v1599, %v1601
    %v1603 = vrot.slane %v1589, %v1602
    %v1604 = vcombine.low %v447, %v455
    %v1605 = vcombine.high %v447, %v455
    %v1607 = vunpack.c.l.s4 1983009808
    %v1608 = vunpack.c.0.s8 %v1607
    %v1609 = vlaneseq
    %v1610 = vshrl.u32 %v1609, 7
    %v1611 = vsub.s32 %v1608, %v1610
    %v1612 = vrot.slane %v1604, %v1611
    %v1614 = vunpack.c.l.s4 1983009808
    %v1615 = vunpack.c.0.s8 %v1614
    %v1616 = vlaneseq
    %v1617 = vshrl.u32 %v1616, 7
    %v1618 = vsub.s32 %v1615, %v1617
    %v1619 = vrot.slane %v1605, %v1618
    %v1620 = vcombine.low %v1564, %v1580
    %v1621 = vcombine.high %v1564, %v1580
    %v1623 = vunpack.c.l.s4 1934713408
    %v1624 = vunpack.c.0.s8 %v1623
    %v1625 = vlaneseq
    %v1626 = vshrl.u32 %v1625, 7
    %v1627 = vsub.s32 %v1624, %v1626
    %v1628 = vrot.slane %v1620, %v1627
    %v1630 = vunpack.c.l.s4 1934713408
    %v1631 = vunpack.c.0.s8 %v1630
    %v1632 = vlaneseq
    %v1633 = vshrl.u32 %v1632, 7
    %v1634 = vsub.s32 %v1631, %v1633
    %v1635 = vrot.slane %v1621, %v1634
    %v1636 = vcombine.low %v1571, %v1587
    %v1637 = vcombine.high %v1571, %v1587
    %v1639 = vunpack.c.l.s4 1934713408
    %v1640 = vunpack.c.0.s8 %v1639
    %v1641 = vlaneseq
    %v1642 = vshrl.u32 %v1641, 7
    %v1643 = vsub.s32 %v1640, %v1642
    %v1644 = vrot.slane %v1636, %v1643
    %v1646 = vunpack.c.l.s4 1934713408
    %v1647 = vunpack.c.0.s8 %v1646
    %v1648 = vlaneseq
    %v1649 = vshrl.u32 %v1648, 7
    %v1650 = vsub.s32 %v1647, %v1649
    %v1651 = vrot.slane %v1637, %v1650
    %v1652 = vcombine.low %v1596, %v1612
    %v1653 = vcombine.high %v1596, %v1612
    %v1655 = vunpack.c.l.s4 1934713408
    %v1656 = vunpack.c.0.s8 %v1655
    %v1657 = vlaneseq
    %v1658 = vshrl.u32 %v1657, 7
    %v1659 = vsub.s32 %v1656, %v1658
    %v1660 = vrot.slane %v1652, %v1659
    %v1662 = vunpack.c.l.s4 1934713408
    %v1663 = vunpack.c.0.s8 %v1662
    %v1664 = vlaneseq
    %v1665 = vshrl.u32 %v1664, 7
    %v1666 = vsub.s32 %v1663, %v1665
    %v1667 = vrot.slane %v1653, %v1666
    %v1668 = vcombine.low %v1603, %v1619
    %v1669 = vcombine.high %v1603, %v1619
    %v1671 = vunpack.c.l.s4 1934713408
    %v1672 = vunpack.c.0.s8 %v1671
    %v1673 = vlaneseq
    %v1674 = vshrl.u32 %v1673, 7
    %v1675 = vsub.s32 %v1672, %v1674
    %v1676 = vrot.slane %v1668, %v1675
    %v1678 = vunpack.c.l.s4 1934713408
    %v1679 = vunpack.c.0.s8 %v1678
    %v1680 = vlaneseq
    %v1681 = vshrl.u32 %v1680, 7
    %v1682 = vsub.s32 %v1679, %v1681
    %v1683 = vrot.slane %v1669, %v1682
    %v1684 = vcombine.low %v1628, %v1660
    %v1685 = vcombine.high %v1628, %v1660
    %v1686 = vcombine.low %v1635, %v1667
    %v1687 = vcombine.high %v1635, %v1667
    %v1688 = vcombine.low %v1644, %v1676
    %v1689 = vcombine.high %v1644, %v1676
    %v1690 = vcombine.low %v1651, %v1683
    %v1691 = vcombine.high %v1651, %v1683
    %v1692 = vcombine.low %v491, %v499
    %v1693 = vcombine.high %v491, %v499
    %v1695 = vunpack.c.l.s4 1983009808
    %v1696 = vunpack.c.0.s8 %v1695
    %v1697 = vlaneseq
    %v1698 = vshrl.u32 %v1697, 7
    %v1699 = vsub.s32 %v1696, %v1698
    %v1700 = vrot.slane %v1692, %v1699
    %v1702 = vunpack.c.l.s4 1983009808
    %v1703 = vunpack.c.0.s8 %v1702
    %v1704 = vlaneseq
    %v1705 = vshrl.u32 %v1704, 7
    %v1706 = vsub.s32 %v1703, %v1705
    %v1707 = vrot.slane %v1693, %v1706
    %v1708 = vcombine.low %v495, %v503
    %v1709 = vcombine.high %v495, %v503
    %v1711 = vunpack.c.l.s4 1983009808
    %v1712 = vunpack.c.0.s8 %v1711
    %v1713 = vlaneseq
    %v1714 = vshrl.u32 %v1713, 7
    %v1715 = vsub.s32 %v1712, %v1714
    %v1716 = vrot.slane %v1708, %v1715
    %v1718 = vunpack.c.l.s4 1983009808
    %v1719 = vunpack.c.0.s8 %v1718
    %v1720 = vlaneseq
    %v1721 = vshrl.u32 %v1720, 7
    %v1722 = vsub.s32 %v1719, %v1721
    %v1723 = vrot.slane %v1709, %v1722
    %v1724 = vcombine.low %v1700, %v1716
    %v1725 = vcombine.high %v1700, %v1716
    %v1727 = vunpack.c.l.s4 1934713408
    %v1728 = vunpack.c.0.s8 %v1727
    %v1729 = vlaneseq
    %v1730 = vshrl.u32 %v1729, 7
    %v1731 = vsub.s32 %v1728, %v1730
    %v1732 = vrot.slane %v1724, %v1731
    %v1734 = vunpack.c.l.s4 1934713408
    %v1735 = vunpack.c.0.s8 %v1734
    %v1736 = vlaneseq
    %v1737 = vshrl.u32 %v1736, 7
    %v1738 = vsub.s32 %v1735, %v1737
    %v1739 = vrot.slane %v1725, %v1738
    %v1740 = vcombine.low %v1707, %v1723
    %v1741 = vcombine.high %v1707, %v1723
    %v1743 = vunpack.c.l.s4 1934713408
    %v1744 = vunpack.c.0.s8 %v1743
    %v1745 = vlaneseq
    %v1746 = vshrl.u32 %v1745, 7
    %v1747 = vsub.s32 %v1744, %v1746
    %v1748 = vrot.slane %v1740, %v1747
    %v1750 = vunpack.c.l.s4 1934713408
    %v1751 = vunpack.c.0.s8 %v1750
    %v1752 = vlaneseq
    %v1753 = vshrl.u32 %v1752, 7
    %v1754 = vsub.s32 %v1751, %v1753
    %v1755 = vrot.slane %v1741, %v1754
    %v1756 = vcombine.high %v1732, 0.0
    %v1757 = vcombine.high %v1739, 0.0
    %v1758 = vcombine.high %v1748, 0.0
    %v1759 = vcombine.high %v1755, 0.0
    %v1760 = vcombine.low %v160, %v164
    %v1761 = vcombine.high %v160, %v164
    %v1763 = vunpack.c.l.s4 1983009808
    %v1764 = vunpack.c.0.s8 %v1763
    %v1765 = vlaneseq
    %v1766 = vshrl.u32 %v1765, 7
    %v1767 = vsub.s32 %v1764, %v1766
    %v1768 = vrot.slane %v1760, %v1767
    %v1770 = vunpack.c.l.s4 1983009808
    %v1771 = vunpack.c.0.s8 %v1770
    %v1772 = vlaneseq
    %v1773 = vshrl.u32 %v1772, 7
    %v1774 = vsub.s32 %v1771, %v1773
    %v1775 = vrot.slane %v1761, %v1774
    %v1776 = vcombine.low %v162, %v166
    %v1777 = vcombine.high %v162, %v166
    %v1779 = vunpack.c.l.s4 1983009808
    %v1780 = vunpack.c.0.s8 %v1779
    %v1781 = vlaneseq
    %v1782 = vshrl.u32 %v1781, 7
    %v1783 = vsub.s32 %v1780, %v1782
    %v1784 = vrot.slane %v1776, %v1783
    %v1786 = vunpack.c.l.s4 1983009808
    %v1787 = vunpack.c.0.s8 %v1786
    %v1788 = vlaneseq
    %v1789 = vshrl.u32 %v1788, 7
    %v1790 = vsub.s32 %v1787, %v1789
    %v1791 = vrot.slane %v1777, %v1790
    %v1792 = vcombine.low %v233, %v241
    %v1793 = vcombine.high %v233, %v241
    %v1795 = vunpack.c.l.s4 1983009808
    %v1796 = vunpack.c.0.s8 %v1795
    %v1797 = vlaneseq
    %v1798 = vshrl.u32 %v1797, 7
    %v1799 = vsub.s32 %v1796, %v1798
    %v1800 = vrot.slane %v1792, %v1799
    %v1802 = vunpack.c.l.s4 1983009808
    %v1803 = vunpack.c.0.s8 %v1802
    %v1804 = vlaneseq
    %v1805 = vshrl.u32 %v1804, 7
    %v1806 = vsub.s32 %v1803, %v1805
    %v1807 = vrot.slane %v1793, %v1806
    %v1808 = vcombine.low %v237, %v245
    %v1809 = vcombine.high %v237, %v245
    %v1811 = vunpack.c.l.s4 1983009808
    %v1812 = vunpack.c.0.s8 %v1811
    %v1813 = vlaneseq
    %v1814 = vshrl.u32 %v1813, 7
    %v1815 = vsub.s32 %v1812, %v1814
    %v1816 = vrot.slane %v1808, %v1815
    %v1818 = vunpack.c.l.s4 1983009808
    %v1819 = vunpack.c.0.s8 %v1818
    %v1820 = vlaneseq
    %v1821 = vshrl.u32 %v1820, 7
    %v1822 = vsub.s32 %v1819, %v1821
    %v1823 = vrot.slane %v1809, %v1822
    %v1824 = vcombine.low %v1768, %v1784
    %v1825 = vcombine.high %v1768, %v1784
    %v1827 = vunpack.c.l.s4 1934713408
    %v1828 = vunpack.c.0.s8 %v1827
    %v1829 = vlaneseq
    %v1830 = vshrl.u32 %v1829, 7
    %v1831 = vsub.s32 %v1828, %v1830
    %v1832 = vrot.slane %v1824, %v1831
    %v1834 = vunpack.c.l.s4 1934713408
    %v1835 = vunpack.c.0.s8 %v1834
    %v1836 = vlaneseq
    %v1837 = vshrl.u32 %v1836, 7
    %v1838 = vsub.s32 %v1835, %v1837
    %v1839 = vrot.slane %v1825, %v1838
    %v1840 = vcombine.low %v1775, %v1791
    %v1841 = vcombine.high %v1775, %v1791
    %v1843 = vunpack.c.l.s4 1934713408
    %v1844 = vunpack.c.0.s8 %v1843
    %v1845 = vlaneseq
    %v1846 = vshrl.u32 %v1845, 7
    %v1847 = vsub.s32 %v1844, %v1846
    %v1848 = vrot.slane %v1840, %v1847
    %v1850 = vunpack.c.l.s4 1934713408
    %v1851 = vunpack.c.0.s8 %v1850
    %v1852 = vlaneseq
    %v1853 = vshrl.u32 %v1852, 7
    %v1854 = vsub.s32 %v1851, %v1853
    %v1855 = vrot.slane %v1841, %v1854
    %v1856 = vcombine.low %v1800, %v1816
    %v1857 = vcombine.high %v1800, %v1816
    %v1859 = vunpack.c.l.s4 1934713408
    %v1860 = vunpack.c.0.s8 %v1859
    %v1861 = vlaneseq
    %v1862 = vshrl.u32 %v1861, 7
    %v1863 = vsub.s32 %v1860, %v1862
    %v1864 = vrot.slane %v1856, %v1863
    %v1866 = vunpack.c.l.s4 1934713408
    %v1867 = vunpack.c.0.s8 %v1866
    %v1868 = vlaneseq
    %v1869 = vshrl.u32 %v1868, 7
    %v1870 = vsub.s32 %v1867, %v1869
    %v1871 = vrot.slane %v1857, %v1870
    %v1872 = vcombine.low %v1807, %v1823
    %v1873 = vcombine.high %v1807, %v1823
    %v1875 = vunpack.c.l.s4 1934713408
    %v1876 = vunpack.c.0.s8 %v1875
    %v1877 = vlaneseq
    %v1878 = vshrl.u32 %v1877, 7
    %v1879 = vsub.s32 %v1876, %v1878
    %v1880 = vrot.slane %v1872, %v1879
    %v1882 = vunpack.c.l.s4 1934713408
    %v1883 = vunpack.c.0.s8 %v1882
    %v1884 = vlaneseq
    %v1885 = vshrl.u32 %v1884, 7
    %v1886 = vsub.s32 %v1883, %v1885
    %v1887 = vrot.slane %v1873, %v1886
    %v1888 = vcombine.low %v1832, %v1864
    %v1889 = vcombine.high %v1832, %v1864
    %v1890 = vcombine.low %v1839, %v1871
    %v1891 = vcombine.high %v1839, %v1871
    %v1892 = vcombine.low %v1848, %v1880
    %v1893 = vcombine.high %v1848, %v1880
    %v1894 = vcombine.low %v1855, %v1887
    %v1895 = vcombine.high %v1855, %v1887
    %v1896 = vcombine.low %v281, %v289
    %v1897 = vcombine.high %v281, %v289
    %v1899 = vunpack.c.l.s4 1983009808
    %v1900 = vunpack.c.0.s8 %v1899
    %v1901 = vlaneseq
    %v1902 = vshrl.u32 %v1901, 7
    %v1903 = vsub.s32 %v1900, %v1902
    %v1904 = vrot.slane %v1896, %v1903
    %v1906 = vunpack.c.l.s4 1983009808
    %v1907 = vunpack.c.0.s8 %v1906
    %v1908 = vlaneseq
    %v1909 = vshrl.u32 %v1908, 7
    %v1910 = vsub.s32 %v1907, %v1909
    %v1911 = vrot.slane %v1897, %v1910
    %v1912 = vcombine.low %v285, %v293
    %v1913 = vcombine.high %v285, %v293
    %v1915 = vunpack.c.l.s4 1983009808
    %v1916 = vunpack.c.0.s8 %v1915
    %v1917 = vlaneseq
    %v1918 = vshrl.u32 %v1917, 7
    %v1919 = vsub.s32 %v1916, %v1918
    %v1920 = vrot.slane %v1912, %v1919
    %v1922 = vunpack.c.l.s4 1983009808
    %v1923 = vunpack.c.0.s8 %v1922
    %v1924 = vlaneseq
    %v1925 = vshrl.u32 %v1924, 7
    %v1926 = vsub.s32 %v1923, %v1925
    %v1927 = vrot.slane %v1913, %v1926
    %v1928 = vcombine.low %v176, %v180
    %v1929 = vcombine.high %v176, %v180
    %v1931 = vunpack.c.l.s4 1983009808
    %v1932 = vunpack.c.0.s8 %v1931
    %v1933 = vlaneseq
    %v1934 = vshrl.u32 %v1933, 7
    %v1935 = vsub.s32 %v1932, %v1934
    %v1936 = vrot.slane %v1928, %v1935
    %v1938 = vunpack.c.l.s4 1983009808
    %v1939 = vunpack.c.0.s8 %v1938
    %v1940 = vlaneseq
    %v1941 = vshrl.u32 %v1940, 7
    %v1942 = vsub.s32 %v1939, %v1941
    %v1943 = vrot.slane %v1929, %v1942
    %v1944 = vcombine.low %v178, %v182
    %v1945 = vcombine.high %v178, %v182
    %v1947 = vunpack.c.l.s4 1983009808
    %v1948 = vunpack.c.0.s8 %v1947
    %v1949 = vlaneseq
    %v1950 = vshrl.u32 %v1949, 7
    %v1951 = vsub.s32 %v1948, %v1950
    %v1952 = vrot.slane %v1944, %v1951
    %v1954 = vunpack.c.l.s4 1983009808
    %v1955 = vunpack.c.0.s8 %v1954
    %v1956 = vlaneseq
    %v1957 = vshrl.u32 %v1956, 7
    %v1958 = vsub.s32 %v1955, %v1957
    %v1959 = vrot.slane %v1945, %v1958
    %v1960 = vcombine.low %v1904, %v1920
    %v1961 = vcombine.high %v1904, %v1920
    %v1963 = vunpack.c.l.s4 1934713408
    %v1964 = vunpack.c.0.s8 %v1963
    %v1965 = vlaneseq
    %v1966 = vshrl.u32 %v1965, 7
    %v1967 = vsub.s32 %v1964, %v1966
    %v1968 = vrot.slane %v1960, %v1967
    %v1970 = vunpack.c.l.s4 1934713408
    %v1971 = vunpack.c.0.s8 %v1970
    %v1972 = vlaneseq
    %v1973 = vshrl.u32 %v1972, 7
    %v1974 = vsub.s32 %v1971, %v1973
    %v1975 = vrot.slane %v1961, %v1974
    %v1976 = vcombine.low %v1911, %v1927
    %v1977 = vcombine.high %v1911, %v1927
    %v1979 = vunpack.c.l.s4 1934713408
    %v1980 = vunpack.c.0.s8 %v1979
    %v1981 = vlaneseq
    %v1982 = vshrl.u32 %v1981, 7
    %v1983 = vsub.s32 %v1980, %v1982
    %v1984 = vrot.slane %v1976, %v1983
    %v1986 = vunpack.c.l.s4 1934713408
    %v1987 = vunpack.c.0.s8 %v1986
    %v1988 = vlaneseq
    %v1989 = vshrl.u32 %v1988, 7
    %v1990 = vsub.s32 %v1987, %v1989
    %v1991 = vrot.slane %v1977, %v1990
    %v1992 = vcombine.low %v1936, %v1952
    %v1993 = vcombine.high %v1936, %v1952
    %v1995 = vunpack.c.l.s4 1934713408
    %v1996 = vunpack.c.0.s8 %v1995
    %v1997 = vlaneseq
    %v1998 = vshrl.u32 %v1997, 7
    %v1999 = vsub.s32 %v1996, %v1998
    %v2000 = vrot.slane %v1992, %v1999
    %v2002 = vunpack.c.l.s4 1934713408
    %v2003 = vunpack.c.0.s8 %v2002
    %v2004 = vlaneseq
    %v2005 = vshrl.u32 %v2004, 7
    %v2006 = vsub.s32 %v2003, %v2005
    %v2007 = vrot.slane %v1993, %v2006
    %v2008 = vcombine.low %v1943, %v1959
    %v2009 = vcombine.high %v1943, %v1959
    %v2011 = vunpack.c.l.s4 1934713408
    %v2012 = vunpack.c.0.s8 %v2011
    %v2013 = vlaneseq
    %v2014 = vshrl.u32 %v2013, 7
    %v2015 = vsub.s32 %v2012, %v2014
    %v2016 = vrot.slane %v2008, %v2015
    %v2018 = vunpack.c.l.s4 1934713408
    %v2019 = vunpack.c.0.s8 %v2018
    %v2020 = vlaneseq
    %v2021 = vshrl.u32 %v2020, 7
    %v2022 = vsub.s32 %v2019, %v2021
    %v2023 = vrot.slane %v2009, %v2022
    %v2024 = vcombine.low %v1968, %v2000
    %v2025 = vcombine.high %v1968, %v2000
    %v2026 = vcombine.low %v1975, %v2007
    %v2027 = vcombine.high %v1975, %v2007
    %v2028 = vcombine.low %v1984, %v2016
    %v2029 = vcombine.high %v1984, %v2016
    %v2030 = vcombine.low %v1991, %v2023
    %v2031 = vcombine.high %v1991, %v2023
    %v2032 = vcombine.low %v345, %v353
    %v2033 = vcombine.high %v345, %v353
    %v2035 = vunpack.c.l.s4 1983009808
    %v2036 = vunpack.c.0.s8 %v2035
    %v2037 = vlaneseq
    %v2038 = vshrl.u32 %v2037, 7
    %v2039 = vsub.s32 %v2036, %v2038
    %v2040 = vrot.slane %v2032, %v2039
    %v2042 = vunpack.c.l.s4 1983009808
    %v2043 = vunpack.c.0.s8 %v2042
    %v2044 = vlaneseq
    %v2045 = vshrl.u32 %v2044, 7
    %v2046 = vsub.s32 %v2043, %v2045
    %v2047 = vrot.slane %v2033, %v2046
    %v2048 = vcombine.low %v349, %v357
    %v2049 = vcombine.high %v349, %v357
    %v2051 = vunpack.c.l.s4 1983009808
    %v2052 = vunpack.c.0.s8 %v2051
    %v2053 = vlaneseq
    %v2054 = vshrl.u32 %v2053, 7
    %v2055 = vsub.s32 %v2052, %v2054
    %v2056 = vrot.slane %v2048, %v2055
    %v2058 = vunpack.c.l.s4 1983009808
    %v2059 = vunpack.c.0.s8 %v2058
    %v2060 = vlaneseq
    %v2061 = vshrl.u32 %v2060, 7
    %v2062 = vsub.s32 %v2059, %v2061
    %v2063 = vrot.slane %v2049, %v2062
    %v2064 = vcombine.low %v393, %v401
    %v2065 = vcombine.high %v393, %v401
    %v2067 = vunpack.c.l.s4 1983009808
    %v2068 = vunpack.c.0.s8 %v2067
    %v2069 = vlaneseq
    %v2070 = vshrl.u32 %v2069, 7
    %v2071 = vsub.s32 %v2068, %v2070
    %v2072 = vrot.slane %v2064, %v2071
    %v2074 = vunpack.c.l.s4 1983009808
    %v2075 = vunpack.c.0.s8 %v2074
    %v2076 = vlaneseq
    %v2077 = vshrl.u32 %v2076, 7
    %v2078 = vsub.s32 %v2075, %v2077
    %v2079 = vrot.slane %v2065, %v2078
    %v2080 = vcombine.low %v397, %v405
    %v2081 = vcombine.high %v397, %v405
    %v2083 = vunpack.c.l.s4 1983009808
    %v2084 = vunpack.c.0.s8 %v2083
    %v2085 = vlaneseq
    %v2086 = vshrl.u32 %v2085, 7
    %v2087 = vsub.s32 %v2084, %v2086
    %v2088 = vrot.slane %v2080, %v2087
    %v2090 = vunpack.c.l.s4 1983009808
    %v2091 = vunpack.c.0.s8 %v2090
    %v2092 = vlaneseq
    %v2093 = vshrl.u32 %v2092, 7
    %v2094 = vsub.s32 %v2091, %v2093
    %v2095 = vrot.slane %v2081, %v2094
    %v2096 = vcombine.low %v2040, %v2056
    %v2097 = vcombine.high %v2040, %v2056
    %v2099 = vunpack.c.l.s4 1934713408
    %v2100 = vunpack.c.0.s8 %v2099
    %v2101 = vlaneseq
    %v2102 = vshrl.u32 %v2101, 7
    %v2103 = vsub.s32 %v2100, %v2102
    %v2104 = vrot.slane %v2096, %v2103
    %v2106 = vunpack.c.l.s4 1934713408
    %v2107 = vunpack.c.0.s8 %v2106
    %v2108 = vlaneseq
    %v2109 = vshrl.u32 %v2108, 7
    %v2110 = vsub.s32 %v2107, %v2109
    %v2111 = vrot.slane %v2097, %v2110
    %v2112 = vcombine.low %v2047, %v2063
    %v2113 = vcombine.high %v2047, %v2063
    %v2115 = vunpack.c.l.s4 1934713408
    %v2116 = vunpack.c.0.s8 %v2115
    %v2117 = vlaneseq
    %v2118 = vshrl.u32 %v2117, 7
    %v2119 = vsub.s32 %v2116, %v2118
    %v2120 = vrot.slane %v2112, %v2119
    %v2122 = vunpack.c.l.s4 1934713408
    %v2123 = vunpack.c.0.s8 %v2122
    %v2124 = vlaneseq
    %v2125 = vshrl.u32 %v2124, 7
    %v2126 = vsub.s32 %v2123, %v2125
    %v2127 = vrot.slane %v2113, %v2126
    %v2128 = vcombine.low %v2072, %v2088
    %v2129 = vcombine.high %v2072, %v2088
    %v2131 = vunpack.c.l.s4 1934713408
    %v2132 = vunpack.c.0.s8 %v2131
    %v2133 = vlaneseq
    %v2134 = vshrl.u32 %v2133, 7
    %v2135 = vsub.s32 %v2132, %v2134
    %v2136 = vrot.slane %v2128, %v2135
    %v2138 = vunpack.c.l.s4 1934713408
    %v2139 = vunpack.c.0.s8 %v2138
    %v2140 = vlaneseq
    %v2141 = vshrl.u32 %v2140, 7
    %v2142 = vsub.s32 %v2139, %v2141
    %v2143 = vrot.slane %v2129, %v2142
    %v2144 = vcombine.low %v2079, %v2095
    %v2145 = vcombine.high %v2079, %v2095
    %v2147 = vunpack.c.l.s4 1934713408
    %v2148 = vunpack.c.0.s8 %v2147
    %v2149 = vlaneseq
    %v2150 = vshrl.u32 %v2149, 7
    %v2151 = vsub.s32 %v2148, %v2150
    %v2152 = vrot.slane %v2144, %v2151
    %v2154 = vunpack.c.l.s4 1934713408
    %v2155 = vunpack.c.0.s8 %v2154
    %v2156 = vlaneseq
    %v2157 = vshrl.u32 %v2156, 7
    %v2158 = vsub.s32 %v2155, %v2157
    %v2159 = vrot.slane %v2145, %v2158
    %v2160 = vcombine.low %v2104, %v2136
    %v2161 = vcombine.high %v2104, %v2136
    %v2162 = vcombine.low %v2111, %v2143
    %v2163 = vcombine.high %v2111, %v2143
    %v2164 = vcombine.low %v2120, %v2152
    %v2165 = vcombine.high %v2120, %v2152
    %v2166 = vcombine.low %v2127, %v2159
    %v2167 = vcombine.high %v2127, %v2159
    %v2168 = vcombine.low %v192, %v196
    %v2169 = vcombine.high %v192, %v196
    %v2171 = vunpack.c.l.s4 1983009808
    %v2172 = vunpack.c.0.s8 %v2171
    %v2173 = vlaneseq
    %v2174 = vshrl.u32 %v2173, 7
    %v2175 = vsub.s32 %v2172, %v2174
    %v2176 = vrot.slane %v2168, %v2175
    %v2178 = vunpack.c.l.s4 1983009808
    %v2179 = vunpack.c.0.s8 %v2178
    %v2180 = vlaneseq
    %v2181 = vshrl.u32 %v2180, 7
    %v2182 = vsub.s32 %v2179, %v2181
    %v2183 = vrot.slane %v2169, %v2182
    %v2184 = vcombine.low %v194, %v198
    %v2185 = vcombine.high %v194, %v198
    %v2187 = vunpack.c.l.s4 1983009808
    %v2188 = vunpack.c.0.s8 %v2187
    %v2189 = vlaneseq
    %v2190 = vshrl.u32 %v2189, 7
    %v2191 = vsub.s32 %v2188, %v2190
    %v2192 = vrot.slane %v2184, %v2191
    %v2194 = vunpack.c.l.s4 1983009808
    %v2195 = vunpack.c.0.s8 %v2194
    %v2196 = vlaneseq
    %v2197 = vshrl.u32 %v2196, 7
    %v2198 = vsub.s32 %v2195, %v2197
    %v2199 = vrot.slane %v2185, %v2198
    %v2200 = vcombine.low %v457, %v465
    %v2201 = vcombine.high %v457, %v465
    %v2203 = vunpack.c.l.s4 1983009808
    %v2204 = vunpack.c.0.s8 %v2203
    %v2205 = vlaneseq
    %v2206 = vshrl.u32 %v2205, 7
    %v2207 = vsub.s32 %v2204, %v2206
    %v2208 = vrot.slane %v2200, %v2207
    %v2210 = vunpack.c.l.s4 1983009808
    %v2211 = vunpack.c.0.s8 %v2210
    %v2212 = vlaneseq
    %v2213 = vshrl.u32 %v2212, 7
    %v2214 = vsub.s32 %v2211, %v2213
    %v2215 = vrot.slane %v2201, %v2214
    %v2216 = vcombine.low %v461, %v469
    %v2217 = vcombine.high %v461, %v469
    %v2219 = vunpack.c.l.s4 1983009808
    %v2220 = vunpack.c.0.s8 %v2219
    %v2221 = vlaneseq
    %v2222 = vshrl.u32 %v2221, 7
    %v2223 = vsub.s32 %v2220, %v2222
    %v2224 = vrot.slane %v2216, %v2223
    %v2226 = vunpack.c.l.s4 1983009808
    %v2227 = vunpack.c.0.s8 %v2226
    %v2228 = vlaneseq
    %v2229 = vshrl.u32 %v2228, 7
    %v2230 = vsub.s32 %v2227, %v2229
    %v2231 = vrot.slane %v2217, %v2230
    %v2232 = vcombine.low %v2176, %v2192
    %v2233 = vcombine.high %v2176, %v2192
    %v2235 = vunpack.c.l.s4 1934713408
    %v2236 = vunpack.c.0.s8 %v2235
    %v2237 = vlaneseq
    %v2238 = vshrl.u32 %v2237, 7
    %v2239 = vsub.s32 %v2236, %v2238
    %v2240 = vrot.slane %v2232, %v2239
    %v2242 = vunpack.c.l.s4 1934713408
    %v2243 = vunpack.c.0.s8 %v2242
    %v2244 = vlaneseq
    %v2245 = vshrl.u32 %v2244, 7
    %v2246 = vsub.s32 %v2243, %v2245
    %v2247 = vrot.slane %v2233, %v2246
    %v2248 = vcombine.low %v2183, %v2199
    %v2249 = vcombine.high %v2183, %v2199
    %v2251 = vunpack.c.l.s4 1934713408
    %v2252 = vunpack.c.0.s8 %v2251
    %v2253 = vlaneseq
    %v2254 = vshrl.u32 %v2253, 7
    %v2255 = vsub.s32 %v2252, %v2254
    %v2256 = vrot.slane %v2248, %v2255
    %v2258 = vunpack.c.l.s4 1934713408
    %v2259 = vunpack.c.0.s8 %v2258
    %v2260 = vlaneseq
    %v2261 = vshrl.u32 %v2260, 7
    %v2262 = vsub.s32 %v2259, %v2261
    %v2263 = vrot.slane %v2249, %v2262
    %v2264 = vcombine.low %v2208, %v2224
    %v2265 = vcombine.high %v2208, %v2224
    %v2267 = vunpack.c.l.s4 1934713408
    %v2268 = vunpack.c.0.s8 %v2267
    %v2269 = vlaneseq
    %v2270 = vshrl.u32 %v2269, 7
    %v2271 = vsub.s32 %v2268, %v2270
    %v2272 = vrot.slane %v2264, %v2271
    %v2274 = vunpack.c.l.s4 1934713408
    %v2275 = vunpack.c.0.s8 %v2274
    %v2276 = vlaneseq
    %v2277 = vshrl.u32 %v2276, 7
    %v2278 = vsub.s32 %v2275, %v2277
    %v2279 = vrot.slane %v2265, %v2278
    %v2280 = vcombine.low %v2215, %v2231
    %v2281 = vcombine.high %v2215, %v2231
    %v2283 = vunpack.c.l.s4 1934713408
    %v2284 = vunpack.c.0.s8 %v2283
    %v2285 = vlaneseq
    %v2286 = vshrl.u32 %v2285, 7
    %v2287 = vsub.s32 %v2284, %v2286
    %v2288 = vrot.slane %v2280, %v2287
    %v2290 = vunpack.c.l.s4 1934713408
    %v2291 = vunpack.c.0.s8 %v2290
    %v2292 = vlaneseq
    %v2293 = vshrl.u32 %v2292, 7
    %v2294 = vsub.s32 %v2291, %v2293
    %v2295 = vrot.slane %v2281, %v2294
    %v2296 = vcombine.low %v2240, %v2272
    %v2297 = vcombine.high %v2240, %v2272
    %v2298 = vcombine.low %v2247, %v2279
    %v2299 = vcombine.high %v2247, %v2279
    %v2300 = vcombine.low %v2256, %v2288
    %v2301 = vcombine.high %v2256, %v2288
    %v2302 = vcombine.low %v2263, %v2295
    %v2303 = vcombine.high %v2263, %v2295
    %v2304 = vcombine.low %v505, %v513
    %v2305 = vcombine.high %v505, %v513
    %v2307 = vunpack.c.l.s4 1983009808
    %v2308 = vunpack.c.0.s8 %v2307
    %v2309 = vlaneseq
    %v2310 = vshrl.u32 %v2309, 7
    %v2311 = vsub.s32 %v2308, %v2310
    %v2312 = vrot.slane %v2304, %v2311
    %v2314 = vunpack.c.l.s4 1983009808
    %v2315 = vunpack.c.0.s8 %v2314
    %v2316 = vlaneseq
    %v2317 = vshrl.u32 %v2316, 7
    %v2318 = vsub.s32 %v2315, %v2317
    %v2319 = vrot.slane %v2305, %v2318
    %v2320 = vcombine.low %v509, %v517
    %v2321 = vcombine.high %v509, %v517
    %v2323 = vunpack.c.l.s4 1983009808
    %v2324 = vunpack.c.0.s8 %v2323
    %v2325 = vlaneseq
    %v2326 = vshrl.u32 %v2325, 7
    %v2327 = vsub.s32 %v2324, %v2326
    %v2328 = vrot.slane %v2320, %v2327
    %v2330 = vunpack.c.l.s4 1983009808
    %v2331 = vunpack.c.0.s8 %v2330
    %v2332 = vlaneseq
    %v2333 = vshrl.u32 %v2332, 7
    %v2334 = vsub.s32 %v2331, %v2333
    %v2335 = vrot.slane %v2321, %v2334
    %v2336 = vcombine.low %v2312, %v2328
    %v2337 = vcombine.high %v2312, %v2328
    %v2339 = vunpack.c.l.s4 1934713408
    %v2340 = vunpack.c.0.s8 %v2339
    %v2341 = vlaneseq
    %v2342 = vshrl.u32 %v2341, 7
    %v2343 = vsub.s32 %v2340, %v2342
    %v2344 = vrot.slane %v2336, %v2343
    %v2346 = vunpack.c.l.s4 1934713408
    %v2347 = vunpack.c.0.s8 %v2346
    %v2348 = vlaneseq
    %v2349 = vshrl.u32 %v2348, 7
    %v2350 = vsub.s32 %v2347, %v2349
    %v2351 = vrot.slane %v2337, %v2350
    %v2352 = vcombine.low %v2319, %v2335
    %v2353 = vcombine.high %v2319, %v2335
    %v2355 = vunpack.c.l.s4 1934713408
    %v2356 = vunpack.c.0.s8 %v2355
    %v2357 = vlaneseq
    %v2358 = vshrl.u32 %v2357, 7
    %v2359 = vsub.s32 %v2356, %v2358
    %v2360 = vrot.slane %v2352, %v2359
    %v2362 = vunpack.c.l.s4 1934713408
    %v2363 = vunpack.c.0.s8 %v2362
    %v2364 = vlaneseq
    %v2365 = vshrl.u32 %v2364, 7
    %v2366 = vsub.s32 %v2363, %v2365
    %v2367 = vrot.slane %v2353, %v2366
    %v2368 = vcombine.high %v2344, 0.0
    %v2369 = vcombine.high %v2351, 0.0
    %v2370 = vcombine.high %v2360, 0.0
    %v2371 = vcombine.high %v2367, 0.0
    %v2372 = vcombine.low %v161, %v165
    %v2373 = vcombine.high %v161, %v165
    %v2375 = vunpack.c.l.s4 1983009808
    %v2376 = vunpack.c.0.s8 %v2375
    %v2377 = vlaneseq
    %v2378 = vshrl.u32 %v2377, 7
    %v2379 = vsub.s32 %v2376, %v2378
    %v2380 = vrot.slane %v2372, %v2379
    %v2382 = vunpack.c.l.s4 1983009808
    %v2383 = vunpack.c.0.s8 %v2382
    %v2384 = vlaneseq
    %v2385 = vshrl.u32 %v2384, 7
    %v2386 = vsub.s32 %v2383, %v2385
    %v2387 = vrot.slane %v2373, %v2386
    %v2388 = vcombine.low %v163, %v167
    %v2389 = vcombine.high %v163, %v167
    %v2391 = vunpack.c.l.s4 1983009808
    %v2392 = vunpack.c.0.s8 %v2391
    %v2393 = vlaneseq
    %v2394 = vshrl.u32 %v2393, 7
    %v2395 = vsub.s32 %v2392, %v2394
    %v2396 = vrot.slane %v2388, %v2395
    %v2398 = vunpack.c.l.s4 1983009808
    %v2399 = vunpack.c.0.s8 %v2398
    %v2400 = vlaneseq
    %v2401 = vshrl.u32 %v2400, 7
    %v2402 = vsub.s32 %v2399, %v2401
    %v2403 = vrot.slane %v2389, %v2402
    %v2404 = vcombine.low %v235, %v243
    %v2405 = vcombine.high %v235, %v243
    %v2407 = vunpack.c.l.s4 1983009808
    %v2408 = vunpack.c.0.s8 %v2407
    %v2409 = vlaneseq
    %v2410 = vshrl.u32 %v2409, 7
    %v2411 = vsub.s32 %v2408, %v2410
    %v2412 = vrot.slane %v2404, %v2411
    %v2414 = vunpack.c.l.s4 1983009808
    %v2415 = vunpack.c.0.s8 %v2414
    %v2416 = vlaneseq
    %v2417 = vshrl.u32 %v2416, 7
    %v2418 = vsub.s32 %v2415, %v2417
    %v2419 = vrot.slane %v2405, %v2418
    %v2420 = vcombine.low %v239, %v247
    %v2421 = vcombine.high %v239, %v247
    %v2423 = vunpack.c.l.s4 1983009808
    %v2424 = vunpack.c.0.s8 %v2423
    %v2425 = vlaneseq
    %v2426 = vshrl.u32 %v2425, 7
    %v2427 = vsub.s32 %v2424, %v2426
    %v2428 = vrot.slane %v2420, %v2427
    %v2430 = vunpack.c.l.s4 1983009808
    %v2431 = vunpack.c.0.s8 %v2430
    %v2432 = vlaneseq
    %v2433 = vshrl.u32 %v2432, 7
    %v2434 = vsub.s32 %v2431, %v2433
    %v2435 = vrot.slane %v2421, %v2434
    %v2436 = vcombine.low %v2380, %v2396
    %v2437 = vcombine.high %v2380, %v2396
    %v2439 = vunpack.c.l.s4 1934713408
    %v2440 = vunpack.c.0.s8 %v2439
    %v2441 = vlaneseq
    %v2442 = vshrl.u32 %v2441, 7
    %v2443 = vsub.s32 %v2440, %v2442
    %v2444 = vrot.slane %v2436, %v2443
    %v2446 = vunpack.c.l.s4 1934713408
    %v2447 = vunpack.c.0.s8 %v2446
    %v2448 = vlaneseq
    %v2449 = vshrl.u32 %v2448, 7
    %v2450 = vsub.s32 %v2447, %v2449
    %v2451 = vrot.slane %v2437, %v2450
    %v2452 = vcombine.low %v2387, %v2403
    %v2453 = vcombine.high %v2387, %v2403
    %v2455 = vunpack.c.l.s4 1934713408
    %v2456 = vunpack.c.0.s8 %v2455
    %v2457 = vlaneseq
    %v2458 = vshrl.u32 %v2457, 7
    %v2459 = vsub.s32 %v2456, %v2458
    %v2460 = vrot.slane %v2452, %v2459
    %v2462 = vunpack.c.l.s4 1934713408
    %v2463 = vunpack.c.0.s8 %v2462
    %v2464 = vlaneseq
    %v2465 = vshrl.u32 %v2464, 7
    %v2466 = vsub.s32 %v2463, %v2465
    %v2467 = vrot.slane %v2453, %v2466
    %v2468 = vcombine.low %v2412, %v2428
    %v2469 = vcombine.high %v2412, %v2428
    %v2471 = vunpack.c.l.s4 1934713408
    %v2472 = vunpack.c.0.s8 %v2471
    %v2473 = vlaneseq
    %v2474 = vshrl.u32 %v2473, 7
    %v2475 = vsub.s32 %v2472, %v2474
    %v2476 = vrot.slane %v2468, %v2475
    %v2478 = vunpack.c.l.s4 1934713408
    %v2479 = vunpack.c.0.s8 %v2478
    %v2480 = vlaneseq
    %v2481 = vshrl.u32 %v2480, 7
    %v2482 = vsub.s32 %v2479, %v2481
    %v2483 = vrot.slane %v2469, %v2482
    %v2484 = vcombine.low %v2419, %v2435
    %v2485 = vcombine.high %v2419, %v2435
    %v2487 = vunpack.c.l.s4 1934713408
    %v2488 = vunpack.c.0.s8 %v2487
    %v2489 = vlaneseq
    %v2490 = vshrl.u32 %v2489, 7
    %v2491 = vsub.s32 %v2488, %v2490
    %v2492 = vrot.slane %v2484, %v2491
    %v2494 = vunpack.c.l.s4 1934713408
    %v2495 = vunpack.c.0.s8 %v2494
    %v2496 = vlaneseq
    %v2497 = vshrl.u32 %v2496, 7
    %v2498 = vsub.s32 %v2495, %v2497
    %v2499 = vrot.slane %v2485, %v2498
    %v2500 = vcombine.low %v2444, %v2476
    %v2501 = vcombine.high %v2444, %v2476
    %v2502 = vcombine.low %v2451, %v2483
    %v2503 = vcombine.high %v2451, %v2483
    %v2504 = vcombine.low %v2460, %v2492
    %v2505 = vcombine.high %v2460, %v2492
    %v2506 = vcombine.low %v2467, %v2499
    %v2507 = vcombine.high %v2467, %v2499
    %v2508 = vcombine.low %v283, %v291
    %v2509 = vcombine.high %v283, %v291
    %v2511 = vunpack.c.l.s4 1983009808
    %v2512 = vunpack.c.0.s8 %v2511
    %v2513 = vlaneseq
    %v2514 = vshrl.u32 %v2513, 7
    %v2515 = vsub.s32 %v2512, %v2514
    %v2516 = vrot.slane %v2508, %v2515
    %v2518 = vunpack.c.l.s4 1983009808
    %v2519 = vunpack.c.0.s8 %v2518
    %v2520 = vlaneseq
    %v2521 = vshrl.u32 %v2520, 7
    %v2522 = vsub.s32 %v2519, %v2521
    %v2523 = vrot.slane %v2509, %v2522
    %v2524 = vcombine.low %v287, %v295
    %v2525 = vcombine.high %v287, %v295
    %v2527 = vunpack.c.l.s4 1983009808
    %v2528 = vunpack.c.0.s8 %v2527
    %v2529 = vlaneseq
    %v2530 = vshrl.u32 %v2529, 7
    %v2531 = vsub.s32 %v2528, %v2530
    %v2532 = vrot.slane %v2524, %v2531
    %v2534 = vunpack.c.l.s4 1983009808
    %v2535 = vunpack.c.0.s8 %v2534
    %v2536 = vlaneseq
    %v2537 = vshrl.u32 %v2536, 7
    %v2538 = vsub.s32 %v2535, %v2537
    %v2539 = vrot.slane %v2525, %v2538
    %v2540 = vcombine.low %v177, %v181
    %v2541 = vcombine.high %v177, %v181
    %v2543 = vunpack.c.l.s4 1983009808
    %v2544 = vunpack.c.0.s8 %v2543
    %v2545 = vlaneseq
    %v2546 = vshrl.u32 %v2545, 7
    %v2547 = vsub.s32 %v2544, %v2546
    %v2548 = vrot.slane %v2540, %v2547
    %v2550 = vunpack.c.l.s4 1983009808
    %v2551 = vunpack.c.0.s8 %v2550
    %v2552 = vlaneseq
    %v2553 = vshrl.u32 %v2552, 7
    %v2554 = vsub.s32 %v2551, %v2553
    %v2555 = vrot.slane %v2541, %v2554
    %v2556 = vcombine.low %v179, %v183
    %v2557 = vcombine.high %v179, %v183
    %v2559 = vunpack.c.l.s4 1983009808
    %v2560 = vunpack.c.0.s8 %v2559
    %v2561 = vlaneseq
    %v2562 = vshrl.u32 %v2561, 7
    %v2563 = vsub.s32 %v2560, %v2562
    %v2564 = vrot.slane %v2556, %v2563
    %v2566 = vunpack.c.l.s4 1983009808
    %v2567 = vunpack.c.0.s8 %v2566
    %v2568 = vlaneseq
    %v2569 = vshrl.u32 %v2568, 7
    %v2570 = vsub.s32 %v2567, %v2569
    %v2571 = vrot.slane %v2557, %v2570
    %v2572 = vcombine.low %v2516, %v2532
    %v2573 = vcombine.high %v2516, %v2532
    %v2575 = vunpack.c.l.s4 1934713408
    %v2576 = vunpack.c.0.s8 %v2575
    %v2577 = vlaneseq
    %v2578 = vshrl.u32 %v2577, 7
    %v2579 = vsub.s32 %v2576, %v2578
    %v2580 = vrot.slane %v2572, %v2579
    %v2582 = vunpack.c.l.s4 1934713408
    %v2583 = vunpack.c.0.s8 %v2582
    %v2584 = vlaneseq
    %v2585 = vshrl.u32 %v2584, 7
    %v2586 = vsub.s32 %v2583, %v2585
    %v2587 = vrot.slane %v2573, %v2586
    %v2588 = vcombine.low %v2523, %v2539
    %v2589 = vcombine.high %v2523, %v2539
    %v2591 = vunpack.c.l.s4 1934713408
    %v2592 = vunpack.c.0.s8 %v2591
    %v2593 = vlaneseq
    %v2594 = vshrl.u32 %v2593, 7
    %v2595 = vsub.s32 %v2592, %v2594
    %v2596 = vrot.slane %v2588, %v2595
    %v2598 = vunpack.c.l.s4 1934713408
    %v2599 = vunpack.c.0.s8 %v2598
    %v2600 = vlaneseq
    %v2601 = vshrl.u32 %v2600, 7
    %v2602 = vsub.s32 %v2599, %v2601
    %v2603 = vrot.slane %v2589, %v2602
    %v2604 = vcombine.low %v2548, %v2564
    %v2605 = vcombine.high %v2548, %v2564
    %v2607 = vunpack.c.l.s4 1934713408
    %v2608 = vunpack.c.0.s8 %v2607
    %v2609 = vlaneseq
    %v2610 = vshrl.u32 %v2609, 7
    %v2611 = vsub.s32 %v2608, %v2610
    %v2612 = vrot.slane %v2604, %v2611
    %v2614 = vunpack.c.l.s4 1934713408
    %v2615 = vunpack.c.0.s8 %v2614
    %v2616 = vlaneseq
    %v2617 = vshrl.u32 %v2616, 7
    %v2618 = vsub.s32 %v2615, %v2617
    %v2619 = vrot.slane %v2605, %v2618
    %v2620 = vcombine.low %v2555, %v2571
    %v2621 = vcombine.high %v2555, %v2571
    %v2623 = vunpack.c.l.s4 1934713408
    %v2624 = vunpack.c.0.s8 %v2623
    %v2625 = vlaneseq
    %v2626 = vshrl.u32 %v2625, 7
    %v2627 = vsub.s32 %v2624, %v2626
    %v2628 = vrot.slane %v2620, %v2627
    %v2630 = vunpack.c.l.s4 1934713408
    %v2631 = vunpack.c.0.s8 %v2630
    %v2632 = vlaneseq
    %v2633 = vshrl.u32 %v2632, 7
    %v2634 = vsub.s32 %v2631, %v2633
    %v2635 = vrot.slane %v2621, %v2634
    %v2636 = vcombine.low %v2580, %v2612
    %v2637 = vcombine.high %v2580, %v2612
    %v2638 = vcombine.low %v2587, %v2619
    %v2639 = vcombine.high %v2587, %v2619
    %v2640 = vcombine.low %v2596, %v2628
    %v2641 = vcombine.high %v2596, %v2628
    %v2642 = vcombine.low %v2603, %v2635
    %v2643 = vcombine.high %v2603, %v2635
    %v2644 = vcombine.low %v347, %v355
    %v2645 = vcombine.high %v347, %v355
    %v2647 = vunpack.c.l.s4 1983009808
    %v2648 = vunpack.c.0.s8 %v2647
    %v2649 = vlaneseq
    %v2650 = vshrl.u32 %v2649, 7
    %v2651 = vsub.s32 %v2648, %v2650
    %v2652 = vrot.slane %v2644, %v2651
    %v2654 = vunpack.c.l.s4 1983009808
    %v2655 = vunpack.c.0.s8 %v2654
    %v2656 = vlaneseq
    %v2657 = vshrl.u32 %v2656, 7
    %v2658 = vsub.s32 %v2655, %v2657
    %v2659 = vrot.slane %v2645, %v2658
    %v2660 = vcombine.low %v351, %v359
    %v2661 = vcombine.high %v351, %v359
    %v2663 = vunpack.c.l.s4 1983009808
    %v2664 = vunpack.c.0.s8 %v2663
    %v2665 = vlaneseq
    %v2666 = vshrl.u32 %v2665, 7
    %v2667 = vsub.s32 %v2664, %v2666
    %v2668 = vrot.slane %v2660, %v2667
    %v2670 = vunpack.c.l.s4 1983009808
    %v2671 = vunpack.c.0.s8 %v2670
    %v2672 = vlaneseq
    %v2673 = vshrl.u32 %v2672, 7
    %v2674 = vsub.s32 %v2671, %v2673
    %v2675 = vrot.slane %v2661, %v2674
    %v2676 = vcombine.low %v395, %v403
    %v2677 = vcombine.high %v395, %v403
    %v2679 = vunpack.c.l.s4 1983009808
    %v2680 = vunpack.c.0.s8 %v2679
    %v2681 = vlaneseq
    %v2682 = vshrl.u32 %v2681, 7
    %v2683 = vsub.s32 %v2680, %v2682
    %v2684 = vrot.slane %v2676, %v2683
    %v2686 = vunpack.c.l.s4 1983009808
    %v2687 = vunpack.c.0.s8 %v2686
    %v2688 = vlaneseq
    %v2689 = vshrl.u32 %v2688, 7
    %v2690 = vsub.s32 %v2687, %v2689
    %v2691 = vrot.slane %v2677, %v2690
    %v2692 = vcombine.low %v399, %v407
    %v2693 = vcombine.high %v399, %v407
    %v2695 = vunpack.c.l.s4 1983009808
    %v2696 = vunpack.c.0.s8 %v2695
    %v2697 = vlaneseq
    %v2698 = vshrl.u32 %v2697, 7
    %v2699 = vsub.s32 %v2696, %v2698
    %v2700 = vrot.slane %v2692, %v2699
    %v2702 = vunpack.c.l.s4 1983009808
    %v2703 = vunpack.c.0.s8 %v2702
    %v2704 = vlaneseq
    %v2705 = vshrl.u32 %v2704, 7
    %v2706 = vsub.s32 %v2703, %v2705
    %v2707 = vrot.slane %v2693, %v2706
    %v2708 = vcombine.low %v2652, %v2668
    %v2709 = vcombine.high %v2652, %v2668
    %v2711 = vunpack.c.l.s4 1934713408
    %v2712 = vunpack.c.0.s8 %v2711
    %v2713 = vlaneseq
    %v2714 = vshrl.u32 %v2713, 7
    %v2715 = vsub.s32 %v2712, %v2714
    %v2716 = vrot.slane %v2708, %v2715
    %v2718 = vunpack.c.l.s4 1934713408
    %v2719 = vunpack.c.0.s8 %v2718
    %v2720 = vlaneseq
    %v2721 = vshrl.u32 %v2720, 7
    %v2722 = vsub.s32 %v2719, %v2721
    %v2723 = vrot.slane %v2709, %v2722
    %v2724 = vcombine.low %v2659, %v2675
    %v2725 = vcombine.high %v2659, %v2675
    %v2727 = vunpack.c.l.s4 1934713408
    %v2728 = vunpack.c.0.s8 %v2727
    %v2729 = vlaneseq
    %v2730 = vshrl.u32 %v2729, 7
    %v2731 = vsub.s32 %v2728, %v2730
    %v2732 = vrot.slane %v2724, %v2731
    %v2734 = vunpack.c.l.s4 1934713408
    %v2735 = vunpack.c.0.s8 %v2734
    %v2736 = vlaneseq
    %v2737 = vshrl.u32 %v2736, 7
    %v2738 = vsub.s32 %v2735, %v2737
    %v2739 = vrot.slane %v2725, %v2738
    %v2740 = vcombine.low %v2684, %v2700
    %v2741 = vcombine.high %v2684, %v2700
    %v2743 = vunpack.c.l.s4 1934713408
    %v2744 = vunpack.c.0.s8 %v2743
    %v2745 = vlaneseq
    %v2746 = vshrl.u32 %v2745, 7
    %v2747 = vsub.s32 %v2744, %v2746
    %v2748 = vrot.slane %v2740, %v2747
    %v2750 = vunpack.c.l.s4 1934713408
    %v2751 = vunpack.c.0.s8 %v2750
    %v2752 = vlaneseq
    %v2753 = vshrl.u32 %v2752, 7
    %v2754 = vsub.s32 %v2751, %v2753
    %v2755 = vrot.slane %v2741, %v2754
    %v2756 = vcombine.low %v2691, %v2707
    %v2757 = vcombine.high %v2691, %v2707
    %v2759 = vunpack.c.l.s4 1934713408
    %v2760 = vunpack.c.0.s8 %v2759
    %v2761 = vlaneseq
    %v2762 = vshrl.u32 %v2761, 7
    %v2763 = vsub.s32 %v2760, %v2762
    %v2764 = vrot.slane %v2756, %v2763
    %v2766 = vunpack.c.l.s4 1934713408
    %v2767 = vunpack.c.0.s8 %v2766
    %v2768 = vlaneseq
    %v2769 = vshrl.u32 %v2768, 7
    %v2770 = vsub.s32 %v2767, %v2769
    %v2771 = vrot.slane %v2757, %v2770
    %v2772 = vcombine.low %v2716, %v2748
    %v2773 = vcombine.high %v2716, %v2748
    %v2774 = vcombine.low %v2723, %v2755
    %v2775 = vcombine.high %v2723, %v2755
    %v2776 = vcombine.low %v2732, %v2764
    %v2777 = vcombine.high %v2732, %v2764
    %v2778 = vcombine.low %v2739, %v2771
    %v2779 = vcombine.high %v2739, %v2771
    %v2780 = vcombine.low %v193, %v197
    %v2781 = vcombine.high %v193, %v197
    %v2783 = vunpack.c.l.s4 1983009808
    %v2784 = vunpack.c.0.s8 %v2783
    %v2785 = vlaneseq
    %v2786 = vshrl.u32 %v2785, 7
    %v2787 = vsub.s32 %v2784, %v2786
    %v2788 = vrot.slane %v2780, %v2787
    %v2790 = vunpack.c.l.s4 1983009808
    %v2791 = vunpack.c.0.s8 %v2790
    %v2792 = vlaneseq
    %v2793 = vshrl.u32 %v2792, 7
    %v2794 = vsub.s32 %v2791, %v2793
    %v2795 = vrot.slane %v2781, %v2794
    %v2796 = vcombine.low %v195, %v199
    %v2797 = vcombine.high %v195, %v199
    %v2799 = vunpack.c.l.s4 1983009808
    %v2800 = vunpack.c.0.s8 %v2799
    %v2801 = vlaneseq
    %v2802 = vshrl.u32 %v2801, 7
    %v2803 = vsub.s32 %v2800, %v2802
    %v2804 = vrot.slane %v2796, %v2803
    %v2806 = vunpack.c.l.s4 1983009808
    %v2807 = vunpack.c.0.s8 %v2806
    %v2808 = vlaneseq
    %v2809 = vshrl.u32 %v2808, 7
    %v2810 = vsub.s32 %v2807, %v2809
    %v2811 = vrot.slane %v2797, %v2810
    %v2812 = vcombine.low %v459, %v467
    %v2813 = vcombine.high %v459, %v467
    %v2815 = vunpack.c.l.s4 1983009808
    %v2816 = vunpack.c.0.s8 %v2815
    %v2817 = vlaneseq
    %v2818 = vshrl.u32 %v2817, 7
    %v2819 = vsub.s32 %v2816, %v2818
    %v2820 = vrot.slane %v2812, %v2819
    %v2822 = vunpack.c.l.s4 1983009808
    %v2823 = vunpack.c.0.s8 %v2822
    %v2824 = vlaneseq
    %v2825 = vshrl.u32 %v2824, 7
    %v2826 = vsub.s32 %v2823, %v2825
    %v2827 = vrot.slane %v2813, %v2826
    %v2828 = vcombine.low %v463, %v471
    %v2829 = vcombine.high %v463, %v471
    %v2831 = vunpack.c.l.s4 1983009808
    %v2832 = vunpack.c.0.s8 %v2831
    %v2833 = vlaneseq
    %v2834 = vshrl.u32 %v2833, 7
    %v2835 = vsub.s32 %v2832, %v2834
    %v2836 = vrot.slane %v2828, %v2835
    %v2838 = vunpack.c.l.s4 1983009808
    %v2839 = vunpack.c.0.s8 %v2838
    %v2840 = vlaneseq
    %v2841 = vshrl.u32 %v2840, 7
    %v2842 = vsub.s32 %v2839, %v2841
    %v2843 = vrot.slane %v2829, %v2842
    %v2844 = vcombine.low %v2788, %v2804
    %v2845 = vcombine.high %v2788, %v2804
    %v2847 = vunpack.c.l.s4 1934713408
    %v2848 = vunpack.c.0.s8 %v2847
    %v2849 = vlaneseq
    %v2850 = vshrl.u32 %v2849, 7
    %v2851 = vsub.s32 %v2848, %v2850
    %v2852 = vrot.slane %v2844, %v2851
    %v2854 = vunpack.c.l.s4 1934713408
    %v2855 = vunpack.c.0.s8 %v2854
    %v2856 = vlaneseq
    %v2857 = vshrl.u32 %v2856, 7
    %v2858 = vsub.s32 %v2855, %v2857
    %v2859 = vrot.slane %v2845, %v2858
    %v2860 = vcombine.low %v2795, %v2811
    %v2861 = vcombine.high %v2795, %v2811
    %v2863 = vunpack.c.l.s4 1934713408
    %v2864 = vunpack.c.0.s8 %v2863
    %v2865 = vlaneseq
    %v2866 = vshrl.u32 %v2865, 7
    %v2867 = vsub.s32 %v2864, %v2866
    %v2868 = vrot.slane %v2860, %v2867
    %v2870 = vunpack.c.l.s4 1934713408
    %v2871 = vunpack.c.0.s8 %v2870
    %v2872 = vlaneseq
    %v2873 = vshrl.u32 %v2872, 7
    %v2874 = vsub.s32 %v2871, %v2873
    %v2875 = vrot.slane %v2861, %v2874
    %v2876 = vcombine.low %v2820, %v2836
    %v2877 = vcombine.high %v2820, %v2836
    %v2879 = vunpack.c.l.s4 1934713408
    %v2880 = vunpack.c.0.s8 %v2879
    %v2881 = vlaneseq
    %v2882 = vshrl.u32 %v2881, 7
    %v2883 = vsub.s32 %v2880, %v2882
    %v2884 = vrot.slane %v2876, %v2883
    %v2886 = vunpack.c.l.s4 1934713408
    %v2887 = vunpack.c.0.s8 %v2886
    %v2888 = vlaneseq
    %v2889 = vshrl.u32 %v2888, 7
    %v2890 = vsub.s32 %v2887, %v2889
    %v2891 = vrot.slane %v2877, %v2890
    %v2892 = vcombine.low %v2827, %v2843
    %v2893 = vcombine.high %v2827, %v2843
    %v2895 = vunpack.c.l.s4 1934713408
    %v2896 = vunpack.c.0.s8 %v2895
    %v2897 = vlaneseq
    %v2898 = vshrl.u32 %v2897, 7
    %v2899 = vsub.s32 %v2896, %v2898
    %v2900 = vrot.slane %v2892, %v2899
    %v2902 = vunpack.c.l.s4 1934713408
    %v2903 = vunpack.c.0.s8 %v2902
    %v2904 = vlaneseq
    %v2905 = vshrl.u32 %v2904, 7
    %v2906 = vsub.s32 %v2903, %v2905
    %v2907 = vrot.slane %v2893, %v2906
    %v2908 = vcombine.low %v2852, %v2884
    %v2909 = vcombine.high %v2852, %v2884
    %v2910 = vcombine.low %v2859, %v2891
    %v2911 = vcombine.high %v2859, %v2891
    %v2912 = vcombine.low %v2868, %v2900
    %v2913 = vcombine.high %v2868, %v2900
    %v2914 = vcombine.low %v2875, %v2907
    %v2915 = vcombine.high %v2875, %v2907
    %v2916 = vcombine.low %v507, %v515
    %v2917 = vcombine.high %v507, %v515
    %v2919 = vunpack.c.l.s4 1983009808
    %v2920 = vunpack.c.0.s8 %v2919
    %v2921 = vlaneseq
    %v2922 = vshrl.u32 %v2921, 7
    %v2923 = vsub.s32 %v2920, %v2922
    %v2924 = vrot.slane %v2916, %v2923
    %v2926 = vunpack.c.l.s4 1983009808
    %v2927 = vunpack.c.0.s8 %v2926
    %v2928 = vlaneseq
    %v2929 = vshrl.u32 %v2928, 7
    %v2930 = vsub.s32 %v2927, %v2929
    %v2931 = vrot.slane %v2917, %v2930
    %v2932 = vcombine.low %v511, %v519
    %v2933 = vcombine.high %v511, %v519
    %v2935 = vunpack.c.l.s4 1983009808
    %v2936 = vunpack.c.0.s8 %v2935
    %v2937 = vlaneseq
    %v2938 = vshrl.u32 %v2937, 7
    %v2939 = vsub.s32 %v2936, %v2938
    %v2940 = vrot.slane %v2932, %v2939
    %v2942 = vunpack.c.l.s4 1983009808
    %v2943 = vunpack.c.0.s8 %v2942
    %v2944 = vlaneseq
    %v2945 = vshrl.u32 %v2944, 7
    %v2946 = vsub.s32 %v2943, %v2945
    %v2947 = vrot.slane %v2933, %v2946
    %v2948 = vcombine.low %v2924, %v2940
    %v2949 = vcombine.high %v2924, %v2940
    %v2951 = vunpack.c.l.s4 1934713408
    %v2952 = vunpack.c.0.s8 %v2951
    %v2953 = vlaneseq
    %v2954 = vshrl.u32 %v2953, 7
    %v2955 = vsub.s32 %v2952, %v2954
    %v2956 = vrot.slane %v2948, %v2955
    %v2958 = vunpack.c.l.s4 1934713408
    %v2959 = vunpack.c.0.s8 %v2958
    %v2960 = vlaneseq
    %v2961 = vshrl.u32 %v2960, 7
    %v2962 = vsub.s32 %v2959, %v2961
    %v2963 = vrot.slane %v2949, %v2962
    %v2964 = vcombine.low %v2931, %v2947
    %v2965 = vcombine.high %v2931, %v2947
    %v2967 = vunpack.c.l.s4 1934713408
    %v2968 = vunpack.c.0.s8 %v2967
    %v2969 = vlaneseq
    %v2970 = vshrl.u32 %v2969, 7
    %v2971 = vsub.s32 %v2968, %v2970
    %v2972 = vrot.slane %v2964, %v2971
    %v2974 = vunpack.c.l.s4 1934713408
    %v2975 = vunpack.c.0.s8 %v2974
    %v2976 = vlaneseq
    %v2977 = vshrl.u32 %v2976, 7
    %v2978 = vsub.s32 %v2975, %v2977
    %v2979 = vrot.slane %v2965, %v2978
    %v2980 = vcombine.high %v2956, 0.0
    %v2981 = vcombine.high %v2963, 0.0
    %v2982 = vcombine.high %v2972, 0.0
    %v2983 = vcombine.high %v2979, 0.0
    %2994 = vrot.lane.b32.xlu0 %v665, 16
    %v2995 = vpop.permute.xlu0 %2994
    %2996 = vrot.lane.b32.xlu0 %v801, 16
    %v2997 = vpop.permute.xlu0 %2996
    %2998 = vrot.lane.b32.xlu0 %v937, 16
    %v2999 = vpop.permute.xlu0 %2998
    %3000 = vrot.lane.b32.xlu0 %v1073, 16
    %v3001 = vpop.permute.xlu0 %3000
    %3002 = vrot.lane.b32.xlu0 %v1144, 16
    %v3003 = vpop.permute.xlu0 %3002
    %3004 = vrot.lane.b32.xlu0 %v1889, 16
    %v3005 = vpop.permute.xlu0 %3004
    %3006 = vrot.lane.b32.xlu0 %v2025, 16
    %v3007 = vpop.permute.xlu0 %3006
    %3008 = vrot.lane.b32.xlu0 %v2161, 16
    %v3009 = vpop.permute.xlu0 %3008
    %3010 = vrot.lane.b32.xlu0 %v2297, 16
    %v3011 = vpop.permute.xlu0 %3010
    %3012 = vrot.lane.b32.xlu0 %v2368, 16
    %v3013 = vpop.permute.xlu0 %3012
    %3034 = vrot.lane.b32.xlu0 %v666, 32
    %v3035 = vpop.permute.xlu0 %3034
    %3036 = vrot.lane.b32.xlu0 %v802, 32
    %v3037 = vpop.permute.xlu0 %3036
    %3038 = vrot.lane.b32.xlu0 %v938, 32
    %v3039 = vpop.permute.xlu0 %3038
    %3040 = vrot.lane.b32.xlu0 %v1074, 32
    %v3041 = vpop.permute.xlu0 %3040
    %3042 = vrot.lane.b32.xlu0 %v1127, 32
    %v3043 = vpop.permute.xlu0 %3042
    %3044 = vrot.lane.b32.xlu0 %v1890, 32
    %v3045 = vpop.permute.xlu0 %3044
    %3046 = vrot.lane.b32.xlu0 %v2026, 32
    %v3047 = vpop.permute.xlu0 %3046
    %3048 = vrot.lane.b32.xlu0 %v2162, 32
    %v3049 = vpop.permute.xlu0 %3048
    %3050 = vrot.lane.b32.xlu0 %v2298, 32
    %v3051 = vpop.permute.xlu0 %3050
    %3052 = vrot.lane.b32.xlu0 %v2351, 32
    %v3053 = vpop.permute.xlu0 %3052
    %3074 = vrot.lane.b32.xlu0 %v667, 48
    %v3075 = vpop.permute.xlu0 %3074
    %3076 = vrot.lane.b32.xlu0 %v803, 48
    %v3077 = vpop.permute.xlu0 %3076
    %3078 = vrot.lane.b32.xlu0 %v939, 48
    %v3079 = vpop.permute.xlu0 %3078
    %3080 = vrot.lane.b32.xlu0 %v1075, 48
    %v3081 = vpop.permute.xlu0 %3080
    %3082 = vrot.lane.b32.xlu0 %v1145, 48
    %v3083 = vpop.permute.xlu0 %3082
    %3084 = vrot.lane.b32.xlu0 %v1891, 48
    %v3085 = vpop.permute.xlu0 %3084
    %3086 = vrot.lane.b32.xlu0 %v2027, 48
    %v3087 = vpop.permute.xlu0 %3086
    %3088 = vrot.lane.b32.xlu0 %v2163, 48
    %v3089 = vpop.permute.xlu0 %3088
    %3090 = vrot.lane.b32.xlu0 %v2299, 48
    %v3091 = vpop.permute.xlu0 %3090
    %3092 = vrot.lane.b32.xlu0 %v2369, 48
    %v3093 = vpop.permute.xlu0 %3092
    %3114 = vrot.lane.b32.xlu0 %v668, 64
    %v3115 = vpop.permute.xlu0 %3114
    %3116 = vrot.lane.b32.xlu0 %v804, 64
    %v3117 = vpop.permute.xlu0 %3116
    %3118 = vrot.lane.b32.xlu0 %v940, 64
    %v3119 = vpop.permute.xlu0 %3118
    %3120 = vrot.lane.b32.xlu0 %v1076, 64
    %v3121 = vpop.permute.xlu0 %3120
    %3122 = vrot.lane.b32.xlu0 %v1136, 64
    %v3123 = vpop.permute.xlu0 %3122
    %3124 = vrot.lane.b32.xlu0 %v1892, 64
    %v3125 = vpop.permute.xlu0 %3124
    %3126 = vrot.lane.b32.xlu0 %v2028, 64
    %v3127 = vpop.permute.xlu0 %3126
    %3128 = vrot.lane.b32.xlu0 %v2164, 64
    %v3129 = vpop.permute.xlu0 %3128
    %3130 = vrot.lane.b32.xlu0 %v2300, 64
    %v3131 = vpop.permute.xlu0 %3130
    %3132 = vrot.lane.b32.xlu0 %v2360, 64
    %v3133 = vpop.permute.xlu0 %3132
    %3154 = vrot.lane.b32.xlu0 %v669, 80
    %v3155 = vpop.permute.xlu0 %3154
    %3156 = vrot.lane.b32.xlu0 %v805, 80
    %v3157 = vpop.permute.xlu0 %3156
    %3158 = vrot.lane.b32.xlu0 %v941, 80
    %v3159 = vpop.permute.xlu0 %3158
    %3160 = vrot.lane.b32.xlu0 %v1077, 80
    %v3161 = vpop.permute.xlu0 %3160
    %3162 = vrot.lane.b32.xlu0 %v1146, 80
    %v3163 = vpop.permute.xlu0 %3162
    %3164 = vrot.lane.b32.xlu0 %v1893, 80
    %v3165 = vpop.permute.xlu0 %3164
    %3166 = vrot.lane.b32.xlu0 %v2029, 80
    %v3167 = vpop.permute.xlu0 %3166
    %3168 = vrot.lane.b32.xlu0 %v2165, 80
    %v3169 = vpop.permute.xlu0 %3168
    %3170 = vrot.lane.b32.xlu0 %v2301, 80
    %v3171 = vpop.permute.xlu0 %3170
    %3172 = vrot.lane.b32.xlu0 %v2370, 80
    %v3173 = vpop.permute.xlu0 %3172
    %3194 = vrot.lane.b32.xlu0 %v670, 96
    %v3195 = vpop.permute.xlu0 %3194
    %3196 = vrot.lane.b32.xlu0 %v806, 96
    %v3197 = vpop.permute.xlu0 %3196
    %3198 = vrot.lane.b32.xlu0 %v942, 96
    %v3199 = vpop.permute.xlu0 %3198
    %3200 = vrot.lane.b32.xlu0 %v1078, 96
    %v3201 = vpop.permute.xlu0 %3200
    %3202 = vrot.lane.b32.xlu0 %v1143, 96
    %v3203 = vpop.permute.xlu0 %3202
    %3204 = vrot.lane.b32.xlu0 %v1894, 96
    %v3205 = vpop.permute.xlu0 %3204
    %3206 = vrot.lane.b32.xlu0 %v2030, 96
    %v3207 = vpop.permute.xlu0 %3206
    %3208 = vrot.lane.b32.xlu0 %v2166, 96
    %v3209 = vpop.permute.xlu0 %3208
    %3210 = vrot.lane.b32.xlu0 %v2302, 96
    %v3211 = vpop.permute.xlu0 %3210
    %3212 = vrot.lane.b32.xlu0 %v2367, 96
    %v3213 = vpop.permute.xlu0 %3212
    %3234 = vrot.lane.b32.xlu0 %v671, 112
    %v3235 = vpop.permute.xlu0 %3234
    %3236 = vrot.lane.b32.xlu0 %v807, 112
    %v3237 = vpop.permute.xlu0 %3236
    %3238 = vrot.lane.b32.xlu0 %v943, 112
    %v3239 = vpop.permute.xlu0 %3238
    %3240 = vrot.lane.b32.xlu0 %v1079, 112
    %v3241 = vpop.permute.xlu0 %3240
    %3242 = vrot.lane.b32.xlu0 %v1147, 112
    %v3243 = vpop.permute.xlu0 %3242
    %3244 = vrot.lane.b32.xlu0 %v1895, 112
    %v3245 = vpop.permute.xlu0 %3244
    %3246 = vrot.lane.b32.xlu0 %v2031, 112
    %v3247 = vpop.permute.xlu0 %3246
    %3248 = vrot.lane.b32.xlu0 %v2167, 112
    %v3249 = vpop.permute.xlu0 %3248
    %3250 = vrot.lane.b32.xlu0 %v2303, 112
    %v3251 = vpop.permute.xlu0 %3250
    %3252 = vrot.lane.b32.xlu0 %v2371, 112
    %v3253 = vpop.permute.xlu0 %3252
    %3274 = vrot.lane.b32.xlu0 %v1277, 16
    %v3275 = vpop.permute.xlu0 %3274
    %3276 = vrot.lane.b32.xlu0 %v1413, 16
    %v3277 = vpop.permute.xlu0 %3276
    %3278 = vrot.lane.b32.xlu0 %v1549, 16
    %v3279 = vpop.permute.xlu0 %3278
    %3280 = vrot.lane.b32.xlu0 %v1685, 16
    %v3281 = vpop.permute.xlu0 %3280
    %3282 = vrot.lane.b32.xlu0 %v1756, 16
    %v3283 = vpop.permute.xlu0 %3282
    %3284 = vrot.lane.b32.xlu0 %v2501, 16
    %v3285 = vpop.permute.xlu0 %3284
    %3286 = vrot.lane.b32.xlu0 %v2637, 16
    %v3287 = vpop.permute.xlu0 %3286
    %3288 = vrot.lane.b32.xlu0 %v2773, 16
    %v3289 = vpop.permute.xlu0 %3288
    %3290 = vrot.lane.b32.xlu0 %v2909, 16
    %v3291 = vpop.permute.xlu0 %3290
    %3292 = vrot.lane.b32.xlu0 %v2980, 16
    %v3293 = vpop.permute.xlu0 %3292
    %3314 = vrot.lane.b32.xlu0 %v1278, 32
    %v3315 = vpop.permute.xlu0 %3314
    %3316 = vrot.lane.b32.xlu0 %v1414, 32
    %v3317 = vpop.permute.xlu0 %3316
    %3318 = vrot.lane.b32.xlu0 %v1550, 32
    %v3319 = vpop.permute.xlu0 %3318
    %3320 = vrot.lane.b32.xlu0 %v1686, 32
    %v3321 = vpop.permute.xlu0 %3320
    %3322 = vrot.lane.b32.xlu0 %v1739, 32
    %v3323 = vpop.permute.xlu0 %3322
    %3324 = vrot.lane.b32.xlu0 %v2502, 32
    %v3325 = vpop.permute.xlu0 %3324
    %3326 = vrot.lane.b32.xlu0 %v2638, 32
    %v3327 = vpop.permute.xlu0 %3326
    %3328 = vrot.lane.b32.xlu0 %v2774, 32
    %v3329 = vpop.permute.xlu0 %3328
    %3330 = vrot.lane.b32.xlu0 %v2910, 32
    %v3331 = vpop.permute.xlu0 %3330
    %3332 = vrot.lane.b32.xlu0 %v2963, 32
    %v3333 = vpop.permute.xlu0 %3332
    %3354 = vrot.lane.b32.xlu0 %v1279, 48
    %v3355 = vpop.permute.xlu0 %3354
    %3356 = vrot.lane.b32.xlu0 %v1415, 48
    %v3357 = vpop.permute.xlu0 %3356
    %3358 = vrot.lane.b32.xlu0 %v1551, 48
    %v3359 = vpop.permute.xlu0 %3358
    %3360 = vrot.lane.b32.xlu0 %v1687, 48
    %v3361 = vpop.permute.xlu0 %3360
    %3362 = vrot.lane.b32.xlu0 %v1757, 48
    %v3363 = vpop.permute.xlu0 %3362
    %3364 = vrot.lane.b32.xlu0 %v2503, 48
    %v3365 = vpop.permute.xlu0 %3364
    %3366 = vrot.lane.b32.xlu0 %v2639, 48
    %v3367 = vpop.permute.xlu0 %3366
    %3368 = vrot.lane.b32.xlu0 %v2775, 48
    %v3369 = vpop.permute.xlu0 %3368
    %3370 = vrot.lane.b32.xlu0 %v2911, 48
    %v3371 = vpop.permute.xlu0 %3370
    %3372 = vrot.lane.b32.xlu0 %v2981, 48
    %v3373 = vpop.permute.xlu0 %3372
    %3394 = vrot.lane.b32.xlu0 %v1280, 64
    %v3395 = vpop.permute.xlu0 %3394
    %3396 = vrot.lane.b32.xlu0 %v1416, 64
    %v3397 = vpop.permute.xlu0 %3396
    %3398 = vrot.lane.b32.xlu0 %v1552, 64
    %v3399 = vpop.permute.xlu0 %3398
    %3400 = vrot.lane.b32.xlu0 %v1688, 64
    %v3401 = vpop.permute.xlu0 %3400
    %3402 = vrot.lane.b32.xlu0 %v1748, 64
    %v3403 = vpop.permute.xlu0 %3402
    %3404 = vrot.lane.b32.xlu0 %v2504, 64
    %v3405 = vpop.permute.xlu0 %3404
    %3406 = vrot.lane.b32.xlu0 %v2640, 64
    %v3407 = vpop.permute.xlu0 %3406
    %3408 = vrot.lane.b32.xlu0 %v2776, 64
    %v3409 = vpop.permute.xlu0 %3408
    %3410 = vrot.lane.b32.xlu0 %v2912, 64
    %v3411 = vpop.permute.xlu0 %3410
    %3412 = vrot.lane.b32.xlu0 %v2972, 64
    %v3413 = vpop.permute.xlu0 %3412
    %3434 = vrot.lane.b32.xlu0 %v1281, 80
    %v3435 = vpop.permute.xlu0 %3434
    %3436 = vrot.lane.b32.xlu0 %v1417, 80
    %v3437 = vpop.permute.xlu0 %3436
    %3438 = vrot.lane.b32.xlu0 %v1553, 80
    %v3439 = vpop.permute.xlu0 %3438
    %3440 = vrot.lane.b32.xlu0 %v1689, 80
    %v3441 = vpop.permute.xlu0 %3440
    %3442 = vrot.lane.b32.xlu0 %v1758, 80
    %v3443 = vpop.permute.xlu0 %3442
    %3444 = vrot.lane.b32.xlu0 %v2505, 80
    %v3445 = vpop.permute.xlu0 %3444
    %3446 = vrot.lane.b32.xlu0 %v2641, 80
    %v3447 = vpop.permute.xlu0 %3446
    %3448 = vrot.lane.b32.xlu0 %v2777, 80
    %v3449 = vpop.permute.xlu0 %3448
    %3450 = vrot.lane.b32.xlu0 %v2913, 80
    %v3451 = vpop.permute.xlu0 %3450
    %3452 = vrot.lane.b32.xlu0 %v2982, 80
    %v3453 = vpop.permute.xlu0 %3452
    %3474 = vrot.lane.b32.xlu0 %v1282, 96
    %v3475 = vpop.permute.xlu0 %3474
    %3476 = vrot.lane.b32.xlu0 %v1418, 96
    %v3477 = vpop.permute.xlu0 %3476
    %3478 = vrot.lane.b32.xlu0 %v1554, 96
    %v3479 = vpop.permute.xlu0 %3478
    %3480 = vrot.lane.b32.xlu0 %v1690, 96
    %v3481 = vpop.permute.xlu0 %3480
    %3482 = vrot.lane.b32.xlu0 %v1755, 96
    %v3483 = vpop.permute.xlu0 %3482
    %3484 = vrot.lane.b32.xlu0 %v2506, 96
    %v3485 = vpop.permute.xlu0 %3484
    %3486 = vrot.lane.b32.xlu0 %v2642, 96
    %v3487 = vpop.permute.xlu0 %3486
    %3488 = vrot.lane.b32.xlu0 %v2778, 96
    %v3489 = vpop.permute.xlu0 %3488
    %3490 = vrot.lane.b32.xlu0 %v2914, 96
    %v3491 = vpop.permute.xlu0 %3490
    %3492 = vrot.lane.b32.xlu0 %v2979, 96
    %v3493 = vpop.permute.xlu0 %3492
    %3514 = vrot.lane.b32.xlu0 %v1283, 112
    %v3515 = vpop.permute.xlu0 %3514
    %3516 = vrot.lane.b32.xlu0 %v1419, 112
    %v3517 = vpop.permute.xlu0 %3516
    %3518 = vrot.lane.b32.xlu0 %v1555, 112
    %v3519 = vpop.permute.xlu0 %3518
    %3520 = vrot.lane.b32.xlu0 %v1691, 112
    %v3521 = vpop.permute.xlu0 %3520
    %3522 = vrot.lane.b32.xlu0 %v1759, 112
    %v3523 = vpop.permute.xlu0 %3522
    %3524 = vrot.lane.b32.xlu0 %v2507, 112
    %v3525 = vpop.permute.xlu0 %3524
    %3526 = vrot.lane.b32.xlu0 %v2643, 112
    %v3527 = vpop.permute.xlu0 %3526
    %3528 = vrot.lane.b32.xlu0 %v2779, 112
    %v3529 = vpop.permute.xlu0 %3528
    %3530 = vrot.lane.b32.xlu0 %v2915, 112
    %v3531 = vpop.permute.xlu0 %3530
    %3532 = vrot.lane.b32.xlu0 %v2983, 112
    %v3533 = vpop.permute.xlu0 %3532
    %vm3544 = vcmask 130048
    %v3545 = vsel %vm3544, %v664, %v2995
    %v3546 = vsel %vm3544, %v800, %v2997
    %v3547 = vsel %vm3544, %v936, %v2999
    %v3548 = vsel %vm3544, %v1072, %v3001
    %v3549 = vsel %vm3544, %v1120, %v3003
    %v3550 = vsel %vm3544, %v1888, %v3005
    %v3551 = vsel %vm3544, %v2024, %v3007
    %v3552 = vsel %vm3544, %v2160, %v3009
    %v3553 = vsel %vm3544, %v2296, %v3011
    %v3554 = vsel %vm3544, %v2344, %v3013
    %vm3555 = vcmask 261120
    %v3556 = vsel %vm3555, %v3545, %v3035
    %v3557 = vsel %vm3555, %v3546, %v3037
    %v3558 = vsel %vm3555, %v3547, %v3039
    %v3559 = vsel %vm3555, %v3548, %v3041
    %v3560 = vsel %vm3555, %v3549, %v3043
    %v3561 = vsel %vm3555, %v3550, %v3045
    %v3562 = vsel %vm3555, %v3551, %v3047
    %v3563 = vsel %vm3555, %v3552, %v3049
    %v3564 = vsel %vm3555, %v3553, %v3051
    %v3565 = vsel %vm3555, %v3554, %v3053
    %vm3566 = vcmask 392192
    %v3567 = vsel %vm3566, %v3556, %v3075
    %v3568 = vsel %vm3566, %v3557, %v3077
    %v3569 = vsel %vm3566, %v3558, %v3079
    %v3570 = vsel %vm3566, %v3559, %v3081
    %v3571 = vsel %vm3566, %v3560, %v3083
    %v3572 = vsel %vm3566, %v3561, %v3085
    %v3573 = vsel %vm3566, %v3562, %v3087
    %v3574 = vsel %vm3566, %v3563, %v3089
    %v3575 = vsel %vm3566, %v3564, %v3091
    %v3576 = vsel %vm3566, %v3565, %v3093
    %vm3577 = vcmask 523264
    %v3578 = vsel %vm3577, %v3567, %v3115
    %v3579 = vsel %vm3577, %v3568, %v3117
    %v3580 = vsel %vm3577, %v3569, %v3119
    %v3581 = vsel %vm3577, %v3570, %v3121
    %v3582 = vsel %vm3577, %v3571, %v3123
    %v3583 = vsel %vm3577, %v3572, %v3125
    %v3584 = vsel %vm3577, %v3573, %v3127
    %v3585 = vsel %vm3577, %v3574, %v3129
    %v3586 = vsel %vm3577, %v3575, %v3131
    %v3587 = vsel %vm3577, %v3576, %v3133
    %vm3588 = vcmask 654336
    %v3589 = vsel %vm3588, %v3578, %v3155
    %v3590 = vsel %vm3588, %v3579, %v3157
    %v3591 = vsel %vm3588, %v3580, %v3159
    %v3592 = vsel %vm3588, %v3581, %v3161
    %v3593 = vsel %vm3588, %v3582, %v3163
    %v3594 = vsel %vm3588, %v3583, %v3165
    %v3595 = vsel %vm3588, %v3584, %v3167
    %v3596 = vsel %vm3588, %v3585, %v3169
    %v3597 = vsel %vm3588, %v3586, %v3171
    %v3598 = vsel %vm3588, %v3587, %v3173
    %vm3599 = vcmask 785408
    %v3600 = vsel %vm3599, %v3589, %v3195
    %v3601 = vsel %vm3599, %v3590, %v3197
    %v3602 = vsel %vm3599, %v3591, %v3199
    %v3603 = vsel %vm3599, %v3592, %v3201
    %v3604 = vsel %vm3599, %v3593, %v3203
    %v3605 = vsel %vm3599, %v3594, %v3205
    %v3606 = vsel %vm3599, %v3595, %v3207
    %v3607 = vsel %vm3599, %v3596, %v3209
    %v3608 = vsel %vm3599, %v3597, %v3211
    %v3609 = vsel %vm3599, %v3598, %v3213
    %vm3610 = vcmask 916480
    %v3611 = vsel %vm3610, %v3600, %v3235
    %v3612 = vsel %vm3610, %v3601, %v3237
    %v3613 = vsel %vm3610, %v3602, %v3239
    %v3614 = vsel %vm3610, %v3603, %v3241
    %v3615 = vsel %vm3610, %v3604, %v3243
    %v3616 = vsel %vm3610, %v3605, %v3245
    %v3617 = vsel %vm3610, %v3606, %v3247
    %v3618 = vsel %vm3610, %v3607, %v3249
    %v3619 = vsel %vm3610, %v3608, %v3251
    %v3620 = vsel %vm3610, %v3609, %v3253
    %v3621 = vsel %vm3544, %v1276, %v3275
    %v3622 = vsel %vm3544, %v1412, %v3277
    %v3623 = vsel %vm3544, %v1548, %v3279
    %v3624 = vsel %vm3544, %v1684, %v3281
    %v3625 = vsel %vm3544, %v1732, %v3283
    %v3626 = vsel %vm3544, %v2500, %v3285
    %v3627 = vsel %vm3544, %v2636, %v3287
    %v3628 = vsel %vm3544, %v2772, %v3289
    %v3629 = vsel %vm3544, %v2908, %v3291
    %v3630 = vsel %vm3544, %v2956, %v3293
    %v3631 = vsel %vm3555, %v3621, %v3315
    %v3632 = vsel %vm3555, %v3622, %v3317
    %v3633 = vsel %vm3555, %v3623, %v3319
    %v3634 = vsel %vm3555, %v3624, %v3321
    %v3635 = vsel %vm3555, %v3625, %v3323
    %v3636 = vsel %vm3555, %v3626, %v3325
    %v3637 = vsel %vm3555, %v3627, %v3327
    %v3638 = vsel %vm3555, %v3628, %v3329
    %v3639 = vsel %vm3555, %v3629, %v3331
    %v3640 = vsel %vm3555, %v3630, %v3333
    %v3641 = vsel %vm3566, %v3631, %v3355
    %v3642 = vsel %vm3566, %v3632, %v3357
    %v3643 = vsel %vm3566, %v3633, %v3359
    %v3644 = vsel %vm3566, %v3634, %v3361
    %v3645 = vsel %vm3566, %v3635, %v3363
    %v3646 = vsel %vm3566, %v3636, %v3365
    %v3647 = vsel %vm3566, %v3637, %v3367
    %v3648 = vsel %vm3566, %v3638, %v3369
    %v3649 = vsel %vm3566, %v3639, %v3371
    %v3650 = vsel %vm3566, %v3640, %v3373
    %v3651 = vsel %vm3577, %v3641, %v3395
    %v3652 = vsel %vm3577, %v3642, %v3397
    %v3653 = vsel %vm3577, %v3643, %v3399
    %v3654 = vsel %vm3577, %v3644, %v3401
    %v3655 = vsel %vm3577, %v3645, %v3403
    %v3656 = vsel %vm3577, %v3646, %v3405
    %v3657 = vsel %vm3577, %v3647, %v3407
    %v3658 = vsel %vm3577, %v3648, %v3409
    %v3659 = vsel %vm3577, %v3649, %v3411
    %v3660 = vsel %vm3577, %v3650, %v3413
    %v3661 = vsel %vm3588, %v3651, %v3435
    %v3662 = vsel %vm3588, %v3652, %v3437
    %v3663 = vsel %vm3588, %v3653, %v3439
    %v3664 = vsel %vm3588, %v3654, %v3441
    %v3665 = vsel %vm3588, %v3655, %v3443
    %v3666 = vsel %vm3588, %v3656, %v3445
    %v3667 = vsel %vm3588, %v3657, %v3447
    %v3668 = vsel %vm3588, %v3658, %v3449
    %v3669 = vsel %vm3588, %v3659, %v3451
    %v3670 = vsel %vm3588, %v3660, %v3453
    %v3671 = vsel %vm3599, %v3661, %v3475
    %v3672 = vsel %vm3599, %v3662, %v3477
    %v3673 = vsel %vm3599, %v3663, %v3479
    %v3674 = vsel %vm3599, %v3664, %v3481
    %v3675 = vsel %vm3599, %v3665, %v3483
    %v3676 = vsel %vm3599, %v3666, %v3485
    %v3677 = vsel %vm3599, %v3667, %v3487
    %v3678 = vsel %vm3599, %v3668, %v3489
    %v3679 = vsel %vm3599, %v3669, %v3491
    %v3680 = vsel %vm3599, %v3670, %v3493
    %v3681 = vsel %vm3610, %v3671, %v3515
    %v3682 = vsel %vm3610, %v3672, %v3517
    %v3683 = vsel %vm3610, %v3673, %v3519
    %v3684 = vsel %vm3610, %v3674, %v3521
    %v3685 = vsel %vm3610, %v3675, %v3523
    %v3686 = vsel %vm3610, %v3676, %v3525
    %v3687 = vsel %vm3610, %v3677, %v3527
    %v3688 = vsel %vm3610, %v3678, %v3529
    %v3689 = vsel %vm3610, %v3679, %v3531
    %v3690 = vsel %vm3610, %v3680, %v3533
    %v3691 = vld [vmem:[%s2] sm:$0xff]
    %v3692 = vld [vmem:[%s1] sm:$0xff]
    %3694 = vset.pattern.permute.xlu0 0
    %3695 = vperm.xlu0 %3694, %v3691
    %v3696 = vpop.permute.xlu0 %3695
    %vm3698 = vcmask 293888
    %v3700 = vsel %vm3698, %v3692, 0
    %vm3702 = vcmask 1043456
    %v3704 = vsel %vm3702, %v3615, 0
    %v3707 = vsel %vm3702, %v3685, 0
    %3709 = vmatprep.subr.mxu0 %v3681
    %3710 = vmatpush1.msra.mxu0 %v3611
    %3711 = vmatprep.subr.mxu0 %v3682
    %3712 = vmatpush1.msra.mxu0 %v3612
    %3713 = vmatprep.subr.mxu0 %v3683
    %3714 = vmatpush1.msra.mxu0 %v3613
    %3715 = vmatprep.subr.mxu0 %v3684
    %3716 = vmatpush1.msra.mxu0 %v3614
    %3717 = vmatprep.subr.mxu0 %v3707
    %3718 = vmatpush1.msra.mxu0 %v3704
    %3719 = vmatprep.subr.mxu0 0.0
    %3720 = vmatpush1.msra.mxu0 0.0
    %3721 = vmatprep.subr.mxu0 0.0
    %3722 = vmatpush1.msra.mxu0 0.0
    %3723 = vmatprep.subr.mxu0 0.0
    %3724 = vmatpush1.msra.mxu0 0.0
    %3725 = vmatprep.subr.mxu0 0.0
    %3726 = vmatpush1.msra.mxu0 0.0
    %3727 = vmatprep.subr.mxu0 0.0
    %3728 = vmatpush1.msra.mxu0 0.0
    %3729 = vmatprep.subr.mxu0 0.0
    %3730 = vmatpush1.msra.mxu0 0.0
    %3731 = vmatprep.subr.mxu0 0.0
    %3732 = vmatpush1.msra.mxu0 0.0
    %3733 = vmatprep.subr.mxu0 0.0
    %3734 = vmatpush1.msra.mxu0 0.0
    %3735 = vmatprep.subr.mxu0 0.0
    %3736 = vmatpush1.msra.mxu0 0.0
    %3737 = vmatprep.subr.mxu0 0.0
    %3738 = vmatpush1.msra.mxu0 0.0
    %3739 = vmatprep.subr.mxu0 0.0
    %3740 = vmatpush1.msra.mxu0 0.0
    %3741 = vmatprep.subr.mxu0 0.0
    %3742 = vmatpush1.msra.mxu0 0.0
    %3743 = vmatprep.subr.mxu0 0.0
    %3744 = vmatpush1.msra.mxu0 0.0
    %3745 = vmatprep.subr.mxu0 0.0
    %3746 = vmatpush1.msra.mxu0 0.0
    %3747 = vmatprep.subr.mxu0 0.0
    %3748 = vmatpush1.msra.mxu0 0.0
    %3749 = vmatprep.subr.mxu0 0.0
    %3750 = vmatpush1.msra.mxu0 0.0
    %3751 = vmatprep.subr.mxu0 0.0
    %3752 = vmatpush1.msra.mxu0 0.0
    %3753 = vmatprep.subr.mxu0 0.0
    %3754 = vmatpush1.msra.mxu0 0.0
    %3755 = vmatprep.subr.mxu0 0.0
    %3756 = vmatpush1.msra.mxu0 0.0
    %3757 = vmatprep.subr.mxu0 0.0
    %3758 = vmatpush1.msra.mxu0 0.0
    %3759 = vmatprep.subr.mxu0 0.0
    %3760 = vmatpush1.msra.mxu0 0.0
    %3761 = vmatprep.subr.mxu0 0.0
    %3762 = vmatpush1.msra.mxu0 0.0
    %3763 = vmatprep.subr.mxu0 0.0
    %3764 = vmatpush1.msra.mxu0 0.0
    %3765 = vmatprep.subr.mxu0 0.0
    %3766 = vmatpush1.msra.mxu0 0.0
    %3767 = vmatprep.subr.mxu0 0.0
    %3768 = vmatpush1.msra.mxu0 0.0
    %3769 = vmatprep.subr.mxu0 0.0
    %3770 = vmatpush1.msra.mxu0 0.0
    %3771 = vmatprep.subr.mxu0 0.0
    %3772 = vmatpush1.msra.mxu0 0.0
    %3773 = vmatprep.mubr.f32.mxu0 0.0
    %3774 = vmatmul.mubr.f32.gmra.mrb[0].mxu0 %v3700
    %v3775 = vpop.f32.mrb[0].mxu0
    %v3776 = vadd.f32 %v3696, %v3775
    %v3777 = vpop.f32.mrb[0].mxu0
    %v3778 = vadd.f32 %v3696, %v3777
    %3779 = vdwg.mxu0
    %3780 = vst [vmem:[#allocation6] sm:$0xff] %v3776
    %3781 = vst [vmem:[#allocation6 + $0x8] sm:$0xff] %v3778
    %v3782 = vld [vmem:[%s1] sm:$0xff]
    %v3784 = vsel %vm3698, %v3782, 0
    %v3787 = vsel %vm3702, %v3620, 0
    %v3790 = vsel %vm3702, %v3690, 0
    %3792 = vmatprep.subr.mxu0 %v3686
    %3793 = vmatpush1.msra.mxu0 %v3616
    %3794 = vmatprep.subr.mxu0 %v3687
    %3795 = vmatpush1.msra.mxu0 %v3617
    %3796 = vmatprep.subr.mxu0 %v3688
    %3797 = vmatpush1.msra.mxu0 %v3618
    %3798 = vmatprep.subr.mxu0 %v3689
    %3799 = vmatpush1.msra.mxu0 %v3619
    %3800 = vmatprep.subr.mxu0 %v3790
    %3801 = vmatpush1.msra.mxu0 %v3787
    %3802 = vmatprep.subr.mxu0 0.0
    %3803 = vmatpush1.msra.mxu0 0.0
    %3804 = vmatprep.subr.mxu0 0.0
    %3805 = vmatpush1.msra.mxu0 0.0
    %3806 = vmatprep.subr.mxu0 0.0
    %3807 = vmatpush1.msra.mxu0 0.0
    %3808 = vmatprep.subr.mxu0 0.0
    %3809 = vmatpush1.msra.mxu0 0.0
    %3810 = vmatprep.subr.mxu0 0.0
    %3811 = vmatpush1.msra.mxu0 0.0
    %3812 = vmatprep.subr.mxu0 0.0
    %3813 = vmatpush1.msra.mxu0 0.0
    %3814 = vmatprep.subr.mxu0 0.0
    %3815 = vmatpush1.msra.mxu0 0.0
    %3816 = vmatprep.subr.mxu0 0.0
    %3817 = vmatpush1.msra.mxu0 0.0
    %3818 = vmatprep.subr.mxu0 0.0
    %3819 = vmatpush1.msra.mxu0 0.0
    %3820 = vmatprep.subr.mxu0 0.0
    %3821 = vmatpush1.msra.mxu0 0.0
    %3822 = vmatprep.subr.mxu0 0.0
    %3823 = vmatpush1.msra.mxu0 0.0
    %3824 = vmatprep.subr.mxu0 0.0
    %3825 = vmatpush1.msra.mxu0 0.0
    %3826 = vmatprep.subr.mxu0 0.0
    %3827 = vmatpush1.msra.mxu0 0.0
    %3828 = vmatprep.subr.mxu0 0.0
    %3829 = vmatpush1.msra.mxu0 0.0
    %3830 = vmatprep.subr.mxu0 0.0
    %3831 = vmatpush1.msra.mxu0 0.0
    %3832 = vmatprep.subr.mxu0 0.0
    %3833 = vmatpush1.msra.mxu0 0.0
    %3834 = vmatprep.subr.mxu0 0.0
    %3835 = vmatpush1.msra.mxu0 0.0
    %3836 = vmatprep.subr.mxu0 0.0
    %3837 = vmatpush1.msra.mxu0 0.0
    %3838 = vmatprep.subr.mxu0 0.0
    %3839 = vmatpush1.msra.mxu0 0.0
    %3840 = vmatprep.subr.mxu0 0.0
    %3841 = vmatpush1.msra.mxu0 0.0
    %3842 = vmatprep.subr.mxu0 0.0
    %3843 = vmatpush1.msra.mxu0 0.0
    %3844 = vmatprep.subr.mxu0 0.0
    %3845 = vmatpush1.msra.mxu0 0.0
    %3846 = vmatprep.subr.mxu0 0.0
    %3847 = vmatpush1.msra.mxu0 0.0
    %3848 = vmatprep.subr.mxu0 0.0
    %3849 = vmatpush1.msra.mxu0 0.0
    %3850 = vmatprep.subr.mxu0 0.0
    %3851 = vmatpush1.msra.mxu0 0.0
    %3852 = vmatprep.subr.mxu0 0.0
    %3853 = vmatpush1.msra.mxu0 0.0
    %3854 = vmatprep.subr.mxu0 0.0
    %3855 = vmatpush1.msra.mxu0 0.0
    %3856 = vmatprep.mubr.f32.mxu0 0.0
    %3857 = vmatmul.mubr.f32.gmra.mrb[0].mxu0 %v3784
    %v3858 = vpop.f32.mrb[0].mxu0
    %v3859 = vadd.f32 %v3696, %v3858
    %v3860 = vpop.f32.mrb[0].mxu0
    %v3861 = vadd.f32 %v3696, %v3860
    %3862 = vdwg.mxu0
    %s3863 = scalar_lea.vmem [#allocation6], 16
    %3864 = vst [vmem:[%s3863] sm:$0xff] %v3859
    %3865 = vst [vmem:[%s3863 + $0x8] sm:$0xff] %v3861
    // Predicated region
    $region18: #{tpu_custom_call.1} parent=1 // pred_check
      _
    $region19: #{tpu_custom_call.1} parent=1 // pred_check_branch
      %3867 = sbr.rel (0) target = $region21
    $region20: #{tpu_custom_call.1} parent=1 // pred_region
      %s3869 = ssub.s32 512, 512
      %3870 = vsyncadd [#allocation5], %s3869
      %s3871 = sshll.u32 [#allocation6], 4
      %s3872 = int_to_ptr.vmem [resolvable:$true] %s3871
      %3877 = dma.vmem_to_hbm [thread:$0]  %s3872, 512, %s3, [#allocation5], 256, 256, 16
    $region21: #{tpu_custom_call.1} parent=1 // pred_fallthru
      _
    // Predicated region
    $region22: #{tpu_custom_call.1} parent=1 // pred_check
      _
    $region23: #{tpu_custom_call.1} parent=1 // pred_check_branch
      %3879 = sbr.rel (0) target = $region25
    $region24: #{tpu_custom_call.1} parent=1 // pred_region
      %3880 = dma.done [#allocation5], 512
    $region25: #{tpu_custom_call.1} parent=1 // pred_fallthru
      _
    %3881 = vsyncpa [#allocation4], 1
    %3882 = vsyncpa [#allocation5], 1

</llo_original>
